<compile_context>
chip_gen: v7x
topology: tpu7x:2x2x1
jax: 0.10.0
libtpu: 0.0.40
codegen_flags: <defaults>
</compile_context>

<pallas_src>
import jax
import jax.numpy as jnp
from jax.experimental import pallas as pl
from jax.experimental.pallas import tpu as pltpu

BN_EPS = 1e-5
PAD = 128        # lane-dense feature padding (input_dim / hidden_dim / output_dim -> 128)
MXU_ROWS = 128   # target node rows per grid step (fills the MXU M dimension)


def _round_up(v, m):
    return (v + m - 1) // m * m


def _pad2(a, rows, cols):
    r, c = a.shape
    return jnp.pad(a, ((0, rows - r), (0, cols - c)))


# --------------------------------------------------------------------------------------
# Fused Pallas kernel: all GCN layers (+folded BN, ReLU) + global_mean_pool + MLP head
# One grid step processes SAMPLES_PER_BLOCK stacked samples (block-diagonal A / pool).
# --------------------------------------------------------------------------------------
def fused_gnn_kernel(x_ref, a_ref, p_ref, w_ref, b_ref, o_ref):
    """
    x_ref : [R, PAD]         bf16  stacked node features of one sample block (R = bb*N)
    a_ref : [R, R]           f32   block-diag normalized adjacency (f32 for accuracy)
    p_ref : [GP, R]          f32   block-diag global-mean-pool matrix
    w_ref : [L+2, PAD, PAD]  bf16  conv weights (BN folded) followed by 2 head weights
    b_ref : [L+2, 1, PAD]    f32   matching (folded) biases
    o_ref : [GP, PAD]        f32   pooled MLP-head output rows
    """
    num_conv = w_ref.shape[0] - 2
    a = a_ref[...]
    h = x_ref[...]
    for l in range(num_conv):                     # static, unrolled layer loop
        # bf16 x bf16 MXU matmul with f32 accumulation; xw stays f32 because the
        # f32 A-matmul consumes it directly (no per-layer down-cast of xw).
        xw = jnp.dot(h, w_ref[l], preferred_element_type=jnp.float32)
        ax = jnp.dot(a, xw, preferred_element_type=jnp.float32)
        hf = jnp.maximum(ax + b_ref[l], 0.0)      # BN already folded into W'/b'
        # Last conv layer's output feeds the f32 pool matmul, so keep it f32.
        h = hf if l == num_conv - 1 else hf.astype(jnp.bfloat16)
        # TODO(synk): dropout after intermediate conv layers is identity (inference).

    pooled = jnp.dot(p_ref[...], h, preferred_element_type=jnp.float32)   # [GP, PAD]
    h1 = jnp.dot(pooled.astype(jnp.bfloat16), w_ref[num_conv],
                 preferred_element_type=jnp.float32) + b_ref[num_conv]
    h1 = jnp.maximum(h1, 0.0)
    # TODO(synk): dropout inside the MLP head is identity (inference mode).
    o_ref[...] = jnp.dot(h1.astype(jnp.bfloat16), w_ref[num_conv + 1],
                         preferred_element_type=jnp.float32) + b_ref[num_conv + 1]


# --------------------------------------------------------------------------------------
# Host-side parameter transform (done ONCE): fold BN, pad to 128 lanes, stack, cast
# --------------------------------------------------------------------------------------
def fold_and_stack_params(params):
    ws, bs = [], []
    for layer in params["convs"]:
        s = layer["gamma"] * jax.lax.rsqrt(layer["var"] + BN_EPS)      # [1, H]
        w_f = layer["w"] * s                                           # [Fin, H]
        b_f = (layer["b"] - layer["mean"]) * s + layer["beta"]         # [1, H]
        ws.append(_pad2(w_f, PAD, PAD))
        bs.append(_pad2(b_f, 1, PAD))
    ws.append(_pad2(params["w1"], PAD, PAD))
    bs.append(_pad2(params["b1"], 1, PAD))
    ws.append(_pad2(params["w2"], PAD, PAD))
    bs.append(_pad2(params["b2"], 1, PAD))
    w_all = jnp.stack(ws).astype(jnp.bfloat16)     # [L+2, PAD, PAD] bf16
    b_all = jnp.stack(bs)                          # [L+2, 1, PAD]   f32
    return w_all, b_all


def make_stock_gnn_forward(a_norm, pool, params, output_dim, samples_per_block=None):
    """Pre-fold/pad/stack everything once; return jitted batched forward.

    Returned fn: x_batch [B, N, input_dim] f32 -> [B, G, output_dim] f32.
    All B samples (timesteps) are assumed to share the same graph (a_norm / pool),
    the usual setup for a per-tick stock graph.
    """
    n = a_norm.shape[0]
    g = pool.shape[0]
    if samples_per_block is None:
        samples_per_block = max(1, MXU_ROWS // n)
    bb = samples_per_block
    r = bb * n                                     # node rows per grid step
    gp = _round_up(bb * g, 8)                      # pooled rows per step (sublane granule)

    # ---------------- hoisted off the per-call path ----------------
    w_all, b_all = fold_and_stack_params(params)
    a_block = jnp.kron(jnp.eye(bb, dtype=jnp.float32),           # [r, r] block-diag, f32
                       a_norm.astype(jnp.float32))
    p_block = jnp.kron(jnp.eye(bb, dtype=jnp.float32),           # [bb*g, r] block-diag, f32
                       pool.astype(jnp.float32))
    p_block = jnp.pad(p_block, ((0, gp - bb * g), (0, 0)))
    num_w = w_all.shape[0]

    def fwd(x_batch):
        b = x_batch.shape[0]
        nb = pl.cdiv(b, bb)                        # grid steps (static under jit)
        b_pad = nb * bb
        xp = jnp.pad(x_batch,
                     ((0, b_pad - b), (0, 0), (0, PAD - x_batch.shape[-1])))
        xp = xp.reshape(nb, r, PAD).astype(jnp.bfloat16)

        out = pl.pallas_call(
            fused_gnn_kernel,
            out_shape=jax.ShapeDtypeStruct((nb, gp, PAD), jnp.float32),
            grid=(nb,),
            in_specs=[
                pl.BlockSpec((None, r, PAD), lambda i: (i, 0, 0)),     # per-step x block
                pl.BlockSpec((r, r), lambda i: (0, 0)),                # constant block ->
                pl.BlockSpec((gp, r), lambda i: (0, 0)),               #   DMA'd only once
                pl.BlockSpec((num_w, PAD, PAD), lambda i: (0, 0, 0)),
                pl.BlockSpec((num_w, 1, PAD), lambda i: (0, 0, 0)),
            ],
            out_specs=pl.BlockSpec((None, gp, PAD), lambda i: (i, 0, 0)),
            compiler_params=pltpu.CompilerParams(
                dimension_semantics=("parallel",)),   # v7x: two TCs split the batch axis
        )(xp, a_block, p_block, w_all, b_all)

        out = out[:, :bb * g, :].reshape(b_pad, g, PAD)
        return out[:b, :, :output_dim]

    return jax.jit(fwd)


# --------------------------------------------------------------------------------------
# Pure-JAX f32 reference (original, unfolded semantics) for correctness checking
# --------------------------------------------------------------------------------------
def reference_forward(x, a_norm, pool, params):
    h = x
    for layer in params["convs"]:
        h = a_norm @ (h @ layer["w"]) + layer["b"]
        h = (h - layer["mean"]) * jax.lax.rsqrt(layer["var"] + BN_EPS) * layer["gamma"] \
            + layer["beta"]
        h = jnp.maximum(h, 0.0)
    pooled = pool @ h
    h1 = jnp.maximum(pooled @ params["w1"] + params["b1"], 0.0)
    return h1 @ params["w2"] + params["b2"]


# --------------------------------------------------------------------------------------
# Graph preprocessing (glue, plain JAX, done once)
# --------------------------------------------------------------------------------------
def build_norm_adj(edge_index, num_nodes):
    """Dense equivalent of PyG gcn_norm: A_hat = A (+ remaining self loops), then
    D^-1/2 A_hat D^-1/2.  Duplicate edges accumulate (scatter-add) and a self loop
    is only added where one is not already present, matching add_remaining_self_loops."""
    src, dst = edge_index[0], edge_index[1]
    a = jnp.zeros((num_nodes, num_nodes), jnp.float32).at[dst, src].add(1.0)
    idx = jnp.arange(num_nodes)
    diag = jnp.diagonal(a)
    a = a.at[idx, idx].set(jnp.where(diag > 0, diag, 1.0))
    deg = a.sum(axis=1)
    d_inv_sqrt = jax.lax.rsqrt(deg)
    return a * d_inv_sqrt[:, None] * d_inv_sqrt[None, :]


def build_pool_matrix(batch, num_graphs):
    """global_mean_pool as a dense [G, N] matrix of 1/count entries."""
    onehot = (batch[None, :] == jnp.arange(num_graphs)[:, None]).astype(jnp.float32)
    counts = onehot.sum(axis=1, keepdims=True)
    return onehot / counts


def init_params(key, input_dim, hidden_dim, output_dim, num_layers):
    dims = [input_dim] + [hidden_dim] * num_layers
    convs = []
    for i in range(num_layers):
        key, kw = jax.random.split(key)
        convs.append(dict(
            w=jax.random.normal(kw, (dims[i], dims[i + 1]), jnp.float32) * 0.2,
            b=jnp.zeros((1, dims[i + 1]), jnp.float32),
            gamma=jnp.ones((1, dims[i + 1]), jnp.float32),
            beta=jnp.zeros((1, dims[i + 1]), jnp.float32),
            mean=jnp.zeros((1, dims[i + 1]), jnp.float32),   # PyTorch BN defaults
            var=jnp.ones((1, dims[i + 1]), jnp.float32),
        ))
    key, k1, k2 = jax.random.split(key, 3)
    return dict(
        convs=convs,
        w1=jax.random.normal(k1, (hidden_dim, hidden_dim), jnp.float32) * 0.2,
        b1=jnp.zeros((1, hidden_dim), jnp.float32),
        w2=jax.random.normal(k2, (hidden_dim, output_dim), jnp.float32) * 0.2,
        b2=jnp.zeros((1, output_dim), jnp.float32),
    )


# --------------------------------------------------------------------------------------
# Main
# --------------------------------------------------------------------------------------
if __name__ == "__main__":
    input_dim, hidden_dim, output_dim, num_layers = 8, 32, 4, 3
    nodes_per_graph, num_graphs = 8, 2
    num_nodes = nodes_per_graph * num_graphs           # 16 nodes per timestep
    batch_size = 16                                     # timesteps batched per call

    key = jax.random.PRNGKey(0)
    key, kx = jax.random.split(key)

    # Batched node features: [B, N, input_dim]
    x_batch = jax.random.normal(kx, (batch_size, num_nodes, input_dim), jnp.float32)

    # Two ring graphs of 8 nodes each; undirected (both directions listed).
    edges = []
    for gidx in range(num_graphs):
        base = gidx * nodes_per_graph
        for i in range(nodes_per_graph):
            u, v = base + i, base + (i + 1) % nodes_per_graph
            edges.append((u, v))
            edges.append((v, u))
    edge_index = jnp.array(edges, jnp.int32).T          # [2, E]
    batch_vec = jnp.repeat(jnp.arange(num_graphs, dtype=jnp.int32), nodes_per_graph)

    a_norm = build_norm_adj(edge_index, num_nodes)       # [N, N]
    pool = build_pool_matrix(batch_vec, num_graphs)      # [G, N]
    params = init_params(key, input_dim, hidden_dim, output_dim, num_layers)

    # All folding / padding / stacking / block-diag work happens ONCE here;
    # the returned closure is jitted end-to-end.
    forward = make_stock_gnn_forward(a_norm, pool, params, output_dim)

    out = jax.block_until_ready(forward(x_batch))        # [B, G, output_dim]

    ref = jax.vmap(lambda xs: reference_forward(xs, a_norm, pool, params))(x_batch)
    assert out.shape == (batch_size, num_graphs, output_dim), out.shape
    # bf16 MXU operands (x, W, inter-layer h) vs f32 reference -> loose-ish tolerance;
    # A_norm / pool matmuls are kept in f32 inside the kernel.
    assert jnp.allclose(out, ref, atol=5e-2, rtol=5e-2), (out, ref)

    print("KERNEL_OK")
</pallas_src>

<mosaic_0001>
module attributes {stable_mosaic.version = 11 : i64} {
  func.func @fused_gnn_kernel(%arg0: i32, %arg1: memref<1x128x128xbf16, #tpu.memory_space<vmem>>, %arg2: memref<128x128xf32, #tpu.memory_space<vmem>>, %arg3: memref<16x128xf32, #tpu.memory_space<vmem>>, %arg4: memref<5x128x128xbf16, #tpu.memory_space<vmem>>, %arg5: memref<5x1x128xf32, #tpu.memory_space<vmem>>, %arg6: memref<1x16x128xf32, #tpu.memory_space<vmem>>) attributes {dimension_semantics = [#tpu.dimension_semantics<parallel>], iteration_bounds = array<i64: 2>, scalar_prefetch = 0 : i64, scratch_operands = 0 : i64, tpu.core_type = #tpu.core_type<tc>, window_params = [{transform_indices = @transform_0, window_bounds = array<i64: 1, 128, 128>}, {pipeline_mode = #tpu.pipeline_mode<synchronous>, transform_indices = @transform_1, window_bounds = array<i64: 128, 128>}, {pipeline_mode = #tpu.pipeline_mode<synchronous>, transform_indices = @transform_2, window_bounds = array<i64: 16, 128>}, {pipeline_mode = #tpu.pipeline_mode<synchronous>, transform_indices = @transform_3, window_bounds = array<i64: 5, 128, 128>}, {pipeline_mode = #tpu.pipeline_mode<synchronous>, transform_indices = @transform_4, window_bounds = array<i64: 5, 1, 128>}, {transform_indices = @transform_5, window_bounds = array<i64: 1, 16, 128>}]} {
    %c0 = arith.constant 0 : index
    %c0_0 = arith.constant 0 : index
    %0 = vector.load %arg2[%c0, %c0_0] : memref<128x128xf32, #tpu.memory_space<vmem>>, vector<128x128xf32>
    %c0_1 = arith.constant 0 : index
    %c0_2 = arith.constant 0 : index
    %c0_3 = arith.constant 0 : index
    %1 = vector.load %arg1[%c0_1, %c0_2, %c0_3] : memref<1x128x128xbf16, #tpu.memory_space<vmem>>, vector<1x128x128xbf16>
    %2 = vector.shape_cast %1 : vector<1x128x128xbf16> to vector<128x128xbf16>
    %c0_4 = arith.constant 0 : index
    %c0_5 = arith.constant 0 : index
    %c0_6 = arith.constant 0 : index
    %3 = vector.load %arg4[%c0_4, %c0_5, %c0_6] : memref<5x128x128xbf16, #tpu.memory_space<vmem>>, vector<1x128x128xbf16>
    %4 = vector.shape_cast %3 : vector<1x128x128xbf16> to vector<128x128xbf16>
    %cst = arith.constant dense<0.000000e+00> : vector<128x128xf32>
    %5 = tpu.matmul %2, %4, %cst {dimension_numbers = #tpu.dot_dimension_numbers<[1], [0], [0], [1], [0, 0, 1, 1], [], []>} : vector<128x128xbf16>, vector<128x128xbf16>, vector<128x128xf32> -> vector<128x128xf32>
    %cst_7 = arith.constant dense<0.000000e+00> : vector<128x128xf32>
    %6 = tpu.matmul %0, %5, %cst_7 {dimension_numbers = #tpu.dot_dimension_numbers<[1], [0], [0], [1], [0, 0, 1, 1], [], []>} : vector<128x128xf32>, vector<128x128xf32>, vector<128x128xf32> -> vector<128x128xf32>
    %c0_8 = arith.constant 0 : index
    %c0_9 = arith.constant 0 : index
    %c0_10 = arith.constant 0 : index
    %7 = vector.load %arg5[%c0_8, %c0_9, %c0_10] : memref<5x1x128xf32, #tpu.memory_space<vmem>>, vector<1x1x128xf32>
    %8 = vector.shape_cast %7 : vector<1x1x128xf32> to vector<1x128xf32>
    %9 = vector.broadcast %8 : vector<1x128xf32> to vector<128x128xf32>
    %10 = arith.addf %6, %9 : vector<128x128xf32>
    %cst_11 = arith.constant 0.000000e+00 : f32
    %11 = vector.broadcast %cst_11 : f32 to vector<128x128xf32>
    %12 = arith.maximumf %10, %11 : vector<128x128xf32>
    %13 = arith.truncf %12 : vector<128x128xf32> to vector<128x128xbf16>
    %c1 = arith.constant 1 : index
    %c0_12 = arith.constant 0 : index
    %c0_13 = arith.constant 0 : index
    %14 = vector.load %arg4[%c1, %c0_12, %c0_13] : memref<5x128x128xbf16, #tpu.memory_space<vmem>>, vector<1x128x128xbf16>
    %15 = vector.shape_cast %14 : vector<1x128x128xbf16> to vector<128x128xbf16>
    %cst_14 = arith.constant dense<0.000000e+00> : vector<128x128xf32>
    %16 = tpu.matmul %13, %15, %cst_14 {dimension_numbers = #tpu.dot_dimension_numbers<[1], [0], [0], [1], [0, 0, 1, 1], [], []>} : vector<128x128xbf16>, vector<128x128xbf16>, vector<128x128xf32> -> vector<128x128xf32>
    %cst_15 = arith.constant dense<0.000000e+00> : vector<128x128xf32>
    %17 = tpu.matmul %0, %16, %cst_15 {dimension_numbers = #tpu.dot_dimension_numbers<[1], [0], [0], [1], [0, 0, 1, 1], [], []>} : vector<128x128xf32>, vector<128x128xf32>, vector<128x128xf32> -> vector<128x128xf32>
    %c1_16 = arith.constant 1 : index
    %c0_17 = arith.constant 0 : index
    %c0_18 = arith.constant 0 : index
    %18 = vector.load %arg5[%c1_16, %c0_17, %c0_18] : memref<5x1x128xf32, #tpu.memory_space<vmem>>, vector<1x1x128xf32>
    %19 = vector.shape_cast %18 : vector<1x1x128xf32> to vector<1x128xf32>
    %20 = vector.broadcast %19 : vector<1x128xf32> to vector<128x128xf32>
    %21 = arith.addf %17, %20 : vector<128x128xf32>
    %cst_19 = arith.constant 0.000000e+00 : f32
    %22 = vector.broadcast %cst_19 : f32 to vector<128x128xf32>
    %23 = arith.maximumf %21, %22 : vector<128x128xf32>
    %24 = arith.truncf %23 : vector<128x128xf32> to vector<128x128xbf16>
    %c2 = arith.constant 2 : index
    %c0_20 = arith.constant 0 : index
    %c0_21 = arith.constant 0 : index
    %25 = vector.load %arg4[%c2, %c0_20, %c0_21] : memref<5x128x128xbf16, #tpu.memory_space<vmem>>, vector<1x128x128xbf16>
    %26 = vector.shape_cast %25 : vector<1x128x128xbf16> to vector<128x128xbf16>
    %cst_22 = arith.constant dense<0.000000e+00> : vector<128x128xf32>
    %27 = tpu.matmul %24, %26, %cst_22 {dimension_numbers = #tpu.dot_dimension_numbers<[1], [0], [0], [1], [0, 0, 1, 1], [], []>} : vector<128x128xbf16>, vector<128x128xbf16>, vector<128x128xf32> -> vector<128x128xf32>
    %cst_23 = arith.constant dense<0.000000e+00> : vector<128x128xf32>
    %28 = tpu.matmul %0, %27, %cst_23 {dimension_numbers = #tpu.dot_dimension_numbers<[1], [0], [0], [1], [0, 0, 1, 1], [], []>} : vector<128x128xf32>, vector<128x128xf32>, vector<128x128xf32> -> vector<128x128xf32>
    %c2_24 = arith.constant 2 : index
    %c0_25 = arith.constant 0 : index
    %c0_26 = arith.constant 0 : index
    %29 = vector.load %arg5[%c2_24, %c0_25, %c0_26] : memref<5x1x128xf32, #tpu.memory_space<vmem>>, vector<1x1x128xf32>
    %30 = vector.shape_cast %29 : vector<1x1x128xf32> to vector<1x128xf32>
    %31 = vector.broadcast %30 : vector<1x128xf32> to vector<128x128xf32>
    %32 = arith.addf %28, %31 : vector<128x128xf32>
    %cst_27 = arith.constant 0.000000e+00 : f32
    %33 = vector.broadcast %cst_27 : f32 to vector<128x128xf32>
    %34 = arith.maximumf %32, %33 : vector<128x128xf32>
    %c0_28 = arith.constant 0 : index
    %c0_29 = arith.constant 0 : index
    %35 = vector.load %arg3[%c0_28, %c0_29] : memref<16x128xf32, #tpu.memory_space<vmem>>, vector<16x128xf32>
    %cst_30 = arith.constant dense<0.000000e+00> : vector<16x128xf32>
    %36 = tpu.matmul %35, %34, %cst_30 {dimension_numbers = #tpu.dot_dimension_numbers<[1], [0], [0], [1], [0, 0, 1, 1], [], []>} : vector<16x128xf32>, vector<128x128xf32>, vector<16x128xf32> -> vector<16x128xf32>
    %37 = arith.truncf %36 : vector<16x128xf32> to vector<16x128xbf16>
    %c3 = arith.constant 3 : index
    %c0_31 = arith.constant 0 : index
    %c0_32 = arith.constant 0 : index
    %38 = vector.load %arg4[%c3, %c0_31, %c0_32] : memref<5x128x128xbf16, #tpu.memory_space<vmem>>, vector<1x128x128xbf16>
    %39 = vector.shape_cast %38 : vector<1x128x128xbf16> to vector<128x128xbf16>
    %cst_33 = arith.constant dense<0.000000e+00> : vector<16x128xf32>
    %40 = tpu.matmul %37, %39, %cst_33 {dimension_numbers = #tpu.dot_dimension_numbers<[1], [0], [0], [1], [0, 0, 1, 1], [], []>} : vector<16x128xbf16>, vector<128x128xbf16>, vector<16x128xf32> -> vector<16x128xf32>
    %c3_34 = arith.constant 3 : index
    %c0_35 = arith.constant 0 : index
    %c0_36 = arith.constant 0 : index
    %41 = vector.load %arg5[%c3_34, %c0_35, %c0_36] : memref<5x1x128xf32, #tpu.memory_space<vmem>>, vector<1x1x128xf32>
    %42 = vector.shape_cast %41 : vector<1x1x128xf32> to vector<1x128xf32>
    %43 = vector.broadcast %42 : vector<1x128xf32> to vector<16x128xf32>
    %44 = arith.addf %40, %43 : vector<16x128xf32>
    %cst_37 = arith.constant 0.000000e+00 : f32
    %45 = vector.broadcast %cst_37 : f32 to vector<16x128xf32>
    %46 = arith.maximumf %44, %45 : vector<16x128xf32>
    %47 = arith.truncf %46 : vector<16x128xf32> to vector<16x128xbf16>
    %c4 = arith.constant 4 : index
    %c0_38 = arith.constant 0 : index
    %c0_39 = arith.constant 0 : index
    %48 = vector.load %arg4[%c4, %c0_38, %c0_39] : memref<5x128x128xbf16, #tpu.memory_space<vmem>>, vector<1x128x128xbf16>
    %49 = vector.shape_cast %48 : vector<1x128x128xbf16> to vector<128x128xbf16>
    %cst_40 = arith.constant dense<0.000000e+00> : vector<16x128xf32>
    %50 = tpu.matmul %47, %49, %cst_40 {dimension_numbers = #tpu.dot_dimension_numbers<[1], [0], [0], [1], [0, 0, 1, 1], [], []>} : vector<16x128xbf16>, vector<128x128xbf16>, vector<16x128xf32> -> vector<16x128xf32>
    %c4_41 = arith.constant 4 : index
    %c0_42 = arith.constant 0 : index
    %c0_43 = arith.constant 0 : index
    %51 = vector.load %arg5[%c4_41, %c0_42, %c0_43] : memref<5x1x128xf32, #tpu.memory_space<vmem>>, vector<1x1x128xf32>
    %52 = vector.shape_cast %51 : vector<1x1x128xf32> to vector<1x128xf32>
    %53 = vector.broadcast %52 : vector<1x128xf32> to vector<16x128xf32>
    %54 = arith.addf %50, %53 : vector<16x128xf32>
    %c0_44 = arith.constant 0 : index
    %c0_45 = arith.constant 0 : index
    %c0_46 = arith.constant 0 : index
    %55 = vector.load %arg6[%c0_44, %c0_45, %c0_46] : memref<1x16x128xf32, #tpu.memory_space<vmem>>, vector<1x16x128xf32>
    %56 = vector.shape_cast %55 : vector<1x16x128xf32> to vector<16x128xf32>
    %57 = vector.shape_cast %54 : vector<16x128xf32> to vector<1x16x128xf32>
    tpu.vector_store %arg6[%c0_44, %c0_45, %c0_46], %57 {strides = array<i32>} : memref<1x16x128xf32, #tpu.memory_space<vmem>>, vector<1x16x128xf32>,
    return
  }
  func.func @transform_0(%arg0: i32) -> (i32, i32, i32) {
    %c0_i32 = arith.constant 0 : i32
    %c0_i32_0 = arith.constant 0 : i32
    %c0_i32_1 = arith.constant 0 : i32
    return %arg0, %c0_i32, %c0_i32_0 : i32, i32, i32
  }
  func.func @transform_1(%arg0: i32) -> (i32, i32) {
    %c0_i32 = arith.constant 0 : i32
    %c0_i32_0 = arith.constant 0 : i32
    %c0_i32_1 = arith.constant 0 : i32
    return %c0_i32, %c0_i32_0 : i32, i32
  }
  func.func @transform_2(%arg0: i32) -> (i32, i32) {
    %c0_i32 = arith.constant 0 : i32
    %c0_i32_0 = arith.constant 0 : i32
    %c0_i32_1 = arith.constant 0 : i32
    return %c0_i32, %c0_i32_0 : i32, i32
  }
  func.func @transform_3(%arg0: i32) -> (i32, i32, i32) {
    %c0_i32 = arith.constant 0 : i32
    %c0_i32_0 = arith.constant 0 : i32
    %c0_i32_1 = arith.constant 0 : i32
    %c0_i32_2 = arith.constant 0 : i32
    return %c0_i32, %c0_i32_0, %c0_i32_1 : i32, i32, i32
  }
  func.func @transform_4(%arg0: i32) -> (i32, i32, i32) {
    %c0_i32 = arith.constant 0 : i32
    %c0_i32_0 = arith.constant 0 : i32
    %c0_i32_1 = arith.constant 0 : i32
    %c0_i32_2 = arith.constant 0 : i32
    return %c0_i32, %c0_i32_0, %c0_i32_1 : i32, i32, i32
  }
  func.func @transform_5(%arg0: i32) -> (i32, i32, i32) {
    %c0_i32 = arith.constant 0 : i32
    %c0_i32_0 = arith.constant 0 : i32
    %c0_i32_1 = arith.constant 0 : i32
    return %arg0, %c0_i32, %c0_i32_0 : i32, i32, i32
  }
}

</mosaic_0001>

<llo_original>
// kernel: fwd.1
$region0: #{fwd.1}
  #allocation0 [shape = 'u32[]', space=smem, size = 0x4, offset = 0x4, fixed_abs, tag = 'smem constant byte address 0x4 - core index']
  #allocation1 [shape = 'u32[144,128]{1,0:T(1,128)}', space=vmem, size = 0x12000, scoped, tag = 'internal scratch']
  %s0 = inlined_call_operand.vmem [shape: bf16[2,128,128], index: 0, kind: input, shape index: {}]
  %s1 = inlined_call_operand.vmem [shape: f32[128,128], index: 1, kind: input, shape index: {}]
  %s2 = inlined_call_operand.vmem [shape: f32[16,128], index: 2, kind: input, shape index: {}]
  %s3 = inlined_call_operand.vmem [shape: bf16[5,128,128], index: 3, kind: input, shape index: {}]
  %s4 = inlined_call_operand.vmem [shape: f32[5,1,128], index: 4, kind: input, shape index: {}]
  %s5 = inlined_call_operand.vmem [shape: f32[2,16,128], index: 5, kind: output, shape index: {}]
  %s6 = sld [smem:[#allocation0]]
  $region53: #{fwd.1} parent=0
    _
  %s8 = ssub.s32 1, %s6
  %s9 = scalar_select 0, %s8, %s6
  loop: start=0, step=1, limit=4
  $region2: #{fwd.1} parent=0 // loop_pre_header
    _
  $region3: #{fwd.1} parent=0 // loop_header
    %s11 = sphi 0, %s15
    %p12 = scmp.ge.s32.totalorder %s11, 4
    %s21 = sphi 0, %s23
    %s24 = sphi 0, %s21
    %s25 = sphi 0, %s24
    %s41 = sphi 0, %s25
    %s45 = sphi 0, %s45
    %s47 = sphi 0, %s45
    %s48 = sphi 0, %s47
    %s62 = sphi 0, %s48
    %s66 = sphi 0, %s66
    %s68 = sphi 0, %s66
    %s69 = sphi 0, %s68
    %s83 = sphi 0, %s69
    %s87 = sphi 0, %s87
    %s89 = sphi 0, %s87
    %s90 = sphi 0, %s89
    %s104 = sphi 0, %s90
    %s108 = sphi 0, %s108
    %s110 = sphi 0, %s108
    %s111 = sphi 0, %s110
    %s125 = sphi 0, %s111
    %s131 = sphi 0, %s133
    %s134 = sphi 0, %s131
    %s135 = sphi 0, %s134
    %s151 = sphi 0, %s135
  $region4: #{fwd.1} parent=0 // loop_header_branch
    %14 = sbr.rel (%p12) target = $region8
  $region5: #{fwd.1} parent=0 // loop_body
    %s16 = ssub.s32 %s11, 1
    %s17 = ssub.s32 %s11, 2
    %s18 = sadd.s32 %s11, 1
    %s19 = ssub.s32 %s11, %s18
    %p20 = scmp.eq.s32.totalorder %s19, 0
    %s22 = sadd.s32 %s21, 1
    %s23 = scalar_select %p20, %s21, %s22
    %p26 = pneg %p20
    %p27 = scmp.eq.s32.totalorder %s11, 1
    %p28 = por %p26, %p27
    %p29 = scmp.ne.s32.totalorder %s21, %s24
    %p30 = scmp.eq.s32.totalorder %s11, 0
    %p31 = por %p29, %p30
    %p32 = scmp.ne.s32.totalorder %s21, %s24
    %p33 = scmp.eq.s32.totalorder %s16, 1
    %p34 = por %p32, %p33
    %p35 = scmp.ne.s32.totalorder %s24, %s25
    %p36 = scmp.eq.s32.totalorder %s16, 0
    %p37 = por %p35, %p36
    %p38 = scmp.ne.s32.totalorder %s24, %s25
    %p39 = scmp.eq.s32.totalorder %s17, 1
    %p40 = por %p38, %p39
    %p42 = scmp.ne.s32.totalorder %s25, %s41
    %p43 = scmp.eq.s32.totalorder %s17, 0
    %p44 = por %p42, %p43
    %s46 = sadd.s32 %s45, 1
    %p49 = scmp.eq.s32.totalorder %s11, 1
    %p50 = scmp.ne.s32.totalorder %s45, %s47
    %p51 = scmp.eq.s32.totalorder %s11, 0
    %p52 = por %p50, %p51
    %p53 = scmp.ne.s32.totalorder %s45, %s47
    %p54 = scmp.eq.s32.totalorder %s16, 1
    %p55 = por %p53, %p54
    %p56 = scmp.ne.s32.totalorder %s47, %s48
    %p57 = scmp.eq.s32.totalorder %s16, 0
    %p58 = por %p56, %p57
    %p59 = scmp.ne.s32.totalorder %s47, %s48
    %p60 = scmp.eq.s32.totalorder %s17, 1
    %p61 = por %p59, %p60
    %p63 = scmp.ne.s32.totalorder %s48, %s62
    %p64 = scmp.eq.s32.totalorder %s17, 0
    %p65 = por %p63, %p64
    %s67 = sadd.s32 %s66, 1
    %p70 = scmp.eq.s32.totalorder %s11, 1
    %p71 = scmp.ne.s32.totalorder %s66, %s68
    %p72 = scmp.eq.s32.totalorder %s11, 0
    %p73 = por %p71, %p72
    %p74 = scmp.ne.s32.totalorder %s66, %s68
    %p75 = scmp.eq.s32.totalorder %s16, 1
    %p76 = por %p74, %p75
    %p77 = scmp.ne.s32.totalorder %s68, %s69
    %p78 = scmp.eq.s32.totalorder %s16, 0
    %p79 = por %p77, %p78
    %p80 = scmp.ne.s32.totalorder %s68, %s69
    %p81 = scmp.eq.s32.totalorder %s17, 1
    %p82 = por %p80, %p81
    %p84 = scmp.ne.s32.totalorder %s69, %s83
    %p85 = scmp.eq.s32.totalorder %s17, 0
    %p86 = por %p84, %p85
    %s88 = sadd.s32 %s87, 1
    %p91 = scmp.eq.s32.totalorder %s11, 1
    %p92 = scmp.ne.s32.totalorder %s87, %s89
    %p93 = scmp.eq.s32.totalorder %s11, 0
    %p94 = por %p92, %p93
    %p95 = scmp.ne.s32.totalorder %s87, %s89
    %p96 = scmp.eq.s32.totalorder %s16, 1
    %p97 = por %p95, %p96
    %p98 = scmp.ne.s32.totalorder %s89, %s90
    %p99 = scmp.eq.s32.totalorder %s16, 0
    %p100 = por %p98, %p99
    %p101 = scmp.ne.s32.totalorder %s89, %s90
    %p102 = scmp.eq.s32.totalorder %s17, 1
    %p103 = por %p101, %p102
    %p105 = scmp.ne.s32.totalorder %s90, %s104
    %p106 = scmp.eq.s32.totalorder %s17, 0
    %p107 = por %p105, %p106
    %s109 = sadd.s32 %s108, 1
    %p112 = scmp.eq.s32.totalorder %s11, 1
    %p113 = scmp.ne.s32.totalorder %s108, %s110
    %p114 = scmp.eq.s32.totalorder %s11, 0
    %p115 = por %p113, %p114
    %p116 = scmp.ne.s32.totalorder %s108, %s110
    %p117 = scmp.eq.s32.totalorder %s16, 1
    %p118 = por %p116, %p117
    %p119 = scmp.ne.s32.totalorder %s110, %s111
    %p120 = scmp.eq.s32.totalorder %s16, 0
    %p121 = por %p119, %p120
    %p122 = scmp.ne.s32.totalorder %s110, %s111
    %p123 = scmp.eq.s32.totalorder %s17, 1
    %p124 = por %p122, %p123
    %p126 = scmp.ne.s32.totalorder %s111, %s125
    %p127 = scmp.eq.s32.totalorder %s17, 0
    %p128 = por %p126, %p127
    %s129 = ssub.s32 %s11, %s18
    %p130 = scmp.eq.s32.totalorder %s129, 0
    %s132 = sadd.s32 %s131, 1
    %s133 = scalar_select %p130, %s131, %s132
    %p136 = pneg %p130
    %p137 = scmp.eq.s32.totalorder %s11, 1
    %p138 = por %p136, %p137
    %p139 = scmp.ne.s32.totalorder %s131, %s134
    %p140 = scmp.eq.s32.totalorder %s11, 0
    %p141 = por %p139, %p140
    %p142 = scmp.ne.s32.totalorder %s131, %s134
    %p143 = scmp.eq.s32.totalorder %s16, 1
    %p144 = por %p142, %p143
    %p145 = scmp.ne.s32.totalorder %s134, %s135
    %p146 = scmp.eq.s32.totalorder %s16, 0
    %p147 = por %p145, %p146
    %p148 = scmp.ne.s32.totalorder %s134, %s135
    %p149 = scmp.eq.s32.totalorder %s17, 1
    %p150 = por %p148, %p149
    %p152 = scmp.ne.s32.totalorder %s135, %s151
    %p153 = scmp.eq.s32.totalorder %s17, 0
    %p154 = por %p152, %p153
    %p155 = scmp.le.s32.totalorder 1, %s11
    %p156 = scmp.lt.s32.totalorder %s11, 3
    %p157 = pnand %p155, %p156
    %p158 = pneg %p157
    // Predicated region
    $region9: #{fwd.1} parent=5 // pred_check
      _
    $region10: #{fwd.1} parent=5 // pred_check_branch
      %160 = sbr.rel (%p157) target = $region12
    $region11: #{fwd.1} parent=5 // pred_region
      %s161 = ssub.s32 %s11, 1
      // Predicated region
      $region13: #{fwd.1} parent=11 // pred_check
        %p162 = pneg %p58
      $region14: #{fwd.1} parent=11 // pred_check_branch
        %164 = sbr.rel (%p162) target = $region16
      $region15: #{fwd.1} parent=11 // pred_region
        _
      $region16: #{fwd.1} parent=11 // pred_fallthru
        _
      // Predicated region
      $region17: #{fwd.1} parent=11 // pred_check
        %p165 = pneg %p79
      $region18: #{fwd.1} parent=11 // pred_check_branch
        %167 = sbr.rel (%p165) target = $region20
      $region19: #{fwd.1} parent=11 // pred_region
        _
      $region20: #{fwd.1} parent=11 // pred_fallthru
        _
      // Predicated region
      $region21: #{fwd.1} parent=11 // pred_check
        %p168 = pneg %p100
      $region22: #{fwd.1} parent=11 // pred_check_branch
        %170 = sbr.rel (%p168) target = $region24
      $region23: #{fwd.1} parent=11 // pred_region
        _
      $region24: #{fwd.1} parent=11 // pred_fallthru
        _
      // Predicated region
      $region25: #{fwd.1} parent=11 // pred_check
        %p171 = pneg %p121
      $region26: #{fwd.1} parent=11 // pred_check_branch
        %173 = sbr.rel (%p171) target = $region28
      $region27: #{fwd.1} parent=11 // pred_region
        _
      $region28: #{fwd.1} parent=11 // pred_fallthru
        _
    $region12: #{fwd.1} parent=5 // pred_fallthru
      _
    %p174 = scmp.lt.s32.totalorder %s11, 2
    // Predicated region
    $region29: #{fwd.1} parent=5 // pred_check
      %p175 = pneg %p174
    $region30: #{fwd.1} parent=5 // pred_check_branch
      %177 = sbr.rel (%p175) target = $region32
    $region31: #{fwd.1} parent=5 // pred_region
      // Predicated region
      $region33: #{fwd.1} parent=31 // pred_check
        %p178 = pneg %p31
      $region34: #{fwd.1} parent=31 // pred_check_branch
        %180 = sbr.rel (%p178) target = $region36
      $region35: #{fwd.1} parent=31 // pred_region
        %p181 = scmp.lt.s32.totalorder %s11, 1
        %s182 = scalar_select %p181, %s11, 1
        %s183 = smul.addr %s182, 16
        %s184 = smul.addr %s183, 4
        %s185 = scalar_lea.vmem %s0, %s184
      $region36: #{fwd.1} parent=31 // pred_fallthru
        _
    $region32: #{fwd.1} parent=5 // pred_fallthru
      _
    %p186 = scmp.le.s32.totalorder 1, %s11
    %p187 = scmp.lt.s32.totalorder %s11, 3
    %p188 = pnand %p186, %p187
    %p189 = pneg %p188
    // Predicated region
    $region37: #{fwd.1} parent=5 // pred_check
      _
    $region38: #{fwd.1} parent=5 // pred_check_branch
      %191 = sbr.rel (%p188) target = $region40
    $region39: #{fwd.1} parent=5 // pred_region
      %s192 = ssub.s32 %s11, 1
      %p193 = scmp.lt.s32.totalorder %s16, 1
      %s194 = scalar_select %p193, %s16, 1
      %s195 = smul.addr %s194, 16
      %s196 = smul.addr %s195, 4
      %s197 = scalar_lea.vmem %s0, %s196
      %p198 = pneg %p37
      %p199 = pneg %p34
      %p200 = pneg %p58
      %p201 = pneg %p55
      %p202 = pneg %p79
      %p203 = pneg %p76
      %p204 = pneg %p100
      %p205 = pneg %p97
      %p206 = pneg %p121
      %p207 = pneg %p118
      %p208 = pneg %p147
      %p209 = pneg %p144
      %p210 = scmp.lt.s32.totalorder %s16, 1
      %s211 = scalar_select %p210, %s16, 1
      %s212 = smul.addr %s211, 2
      %s213 = smul.addr %s212, 8
      %s214 = scalar_lea.vmem %s5, %s213
      %p215 = scmp.lt.s32.totalorder %s16, 1
      %s216 = scalar_select %p215, %s16, 1
      %s217 = smul.addr %s216, 16
      %s218 = smul.addr %s217, 4
      %s219 = scalar_lea.vmem %s0, %s218
      %p220 = scmp.lt.s32.totalorder %s16, 1
      %s221 = scalar_select %p220, %s16, 1
      %s222 = smul.addr %s221, 2
      %s223 = smul.addr %s222, 8
      %s224 = scalar_lea.vmem %s5, %s223
      %v226 = vld [vmem:[%s1] sm:$0xff]
      %v227 = vld [vmem:[%s1 + $0x8] sm:$0xff]
      %v228 = vld [vmem:[%s1 + $0x10] sm:$0xff]
      %v229 = vld [vmem:[%s1 + $0x18] sm:$0xff]
      %v230 = vld [vmem:[%s1 + $0x20] sm:$0xff]
      %v231 = vld [vmem:[%s1 + $0x28] sm:$0xff]
      %v232 = vld [vmem:[%s1 + $0x30] sm:$0xff]
      %v233 = vld [vmem:[%s1 + $0x38] sm:$0xff]
      %v234 = vld [vmem:[%s1 + $0x40] sm:$0xff]
      %v235 = vld [vmem:[%s1 + $0x48] sm:$0xff]
      %v236 = vld [vmem:[%s1 + $0x50] sm:$0xff]
      %v237 = vld [vmem:[%s1 + $0x58] sm:$0xff]
      %v238 = vld [vmem:[%s1 + $0x60] sm:$0xff]
      %v239 = vld [vmem:[%s1 + $0x68] sm:$0xff]
      %v240 = vld [vmem:[%s1 + $0x70] sm:$0xff]
      %v241 = vld [vmem:[%s1 + $0x78] sm:$0xff]
      %v242 = vld [vmem:[%s219] sm:$0xf]
      %v243 = vld [vmem:[%s219 + $0x4] sm:$0xf]
      %v244 = vld [vmem:[%s219 + $0x8] sm:$0xf]
      %v245 = vld [vmem:[%s219 + $0xc] sm:$0xf]
      %v246 = vld [vmem:[%s219 + $0x10] sm:$0xf]
      %v247 = vld [vmem:[%s219 + $0x14] sm:$0xf]
      %v248 = vld [vmem:[%s219 + $0x18] sm:$0xf]
      %v249 = vld [vmem:[%s219 + $0x1c] sm:$0xf]
      %v250 = vld [vmem:[%s219 + $0x20] sm:$0xf]
      %v251 = vld [vmem:[%s219 + $0x24] sm:$0xf]
      %v252 = vld [vmem:[%s219 + $0x28] sm:$0xf]
      %v253 = vld [vmem:[%s219 + $0x2c] sm:$0xf]
      %v254 = vld [vmem:[%s219 + $0x30] sm:$0xf]
      %v255 = vld [vmem:[%s219 + $0x34] sm:$0xf]
      %v256 = vld [vmem:[%s219 + $0x38] sm:$0xf]
      %v257 = vld [vmem:[%s219 + $0x3c] sm:$0xf]
      %v258 = vld [vmem:[%s3] sm:$0xf]
      %v259 = vld [vmem:[%s3 + $0x4] sm:$0xf]
      %v260 = vld [vmem:[%s3 + $0x8] sm:$0xf]
      %v261 = vld [vmem:[%s3 + $0xc] sm:$0xf]
      %v262 = vld [vmem:[%s3 + $0x10] sm:$0xf]
      %v263 = vld [vmem:[%s3 + $0x14] sm:$0xf]
      %v264 = vld [vmem:[%s3 + $0x18] sm:$0xf]
      %v265 = vld [vmem:[%s3 + $0x1c] sm:$0xf]
      %v266 = vld [vmem:[%s3 + $0x20] sm:$0xf]
      %v267 = vld [vmem:[%s3 + $0x24] sm:$0xf]
      %v268 = vld [vmem:[%s3 + $0x28] sm:$0xf]
      %v269 = vld [vmem:[%s3 + $0x2c] sm:$0xf]
      %v270 = vld [vmem:[%s3 + $0x30] sm:$0xf]
      %v271 = vld [vmem:[%s3 + $0x34] sm:$0xf]
      %v272 = vld [vmem:[%s3 + $0x38] sm:$0xf]
      %v273 = vld [vmem:[%s3 + $0x3c] sm:$0xf]
      %v290 = vunpack.c.l.b16 %v242
      %v291 = vunpack.c.l.b16 %v243
      %v292 = vunpack.c.l.b16 %v244
      %v293 = vunpack.c.l.b16 %v245
      %v294 = vunpack.c.l.b16 %v246
      %v295 = vunpack.c.l.b16 %v247
      %v296 = vunpack.c.l.b16 %v248
      %v297 = vunpack.c.l.b16 %v249
      %v298 = vunpack.c.l.b16 %v250
      %v299 = vunpack.c.l.b16 %v251
      %v300 = vunpack.c.l.b16 %v252
      %v301 = vunpack.c.l.b16 %v253
      %v302 = vunpack.c.l.b16 %v254
      %v303 = vunpack.c.l.b16 %v255
      %v304 = vunpack.c.l.b16 %v256
      %v305 = vunpack.c.l.b16 %v257
      %v306 = vpack.c.b16 %v291, %v290
      %v307 = vpack.c.b16 %v293, %v292
      %v308 = vpack.c.b16 %v295, %v294
      %v309 = vpack.c.b16 %v297, %v296
      %v310 = vpack.c.b16 %v299, %v298
      %v311 = vpack.c.b16 %v301, %v300
      %v312 = vpack.c.b16 %v303, %v302
      %v313 = vpack.c.b16 %v305, %v304
      %v338 = vunpack.c.l.b16 %v258
      %v339 = vunpack.c.l.b16 %v259
      %v340 = vunpack.c.l.b16 %v260
      %v341 = vunpack.c.l.b16 %v261
      %v342 = vunpack.c.l.b16 %v262
      %v343 = vunpack.c.l.b16 %v263
      %v344 = vunpack.c.l.b16 %v264
      %v345 = vunpack.c.l.b16 %v265
      %v346 = vunpack.c.l.b16 %v266
      %v347 = vunpack.c.l.b16 %v267
      %v348 = vunpack.c.l.b16 %v268
      %v349 = vunpack.c.l.b16 %v269
      %v350 = vunpack.c.l.b16 %v270
      %v351 = vunpack.c.l.b16 %v271
      %v352 = vunpack.c.l.b16 %v272
      %v353 = vunpack.c.l.b16 %v273
      %v354 = vpack.c.b16 %v339, %v338
      %v355 = vpack.c.b16 %v341, %v340
      %v356 = vpack.c.b16 %v343, %v342
      %v357 = vpack.c.b16 %v345, %v344
      %v358 = vpack.c.b16 %v347, %v346
      %v359 = vpack.c.b16 %v349, %v348
      %v360 = vpack.c.b16 %v351, %v350
      %v361 = vpack.c.b16 %v353, %v352
      %370 = vmatprep.subr.bf16.mxu0 0
      %371 = vmatpush1.bf16.msra.mxu0 %v354
      %372 = vmatprep.subr.bf16.mxu0 0
      %373 = vmatpush1.bf16.msra.mxu0 %v355
      %374 = vmatprep.subr.bf16.mxu0 0
      %375 = vmatpush1.bf16.msra.mxu0 %v356
      %376 = vmatprep.subr.bf16.mxu0 0
      %377 = vmatpush1.bf16.msra.mxu0 %v357
      %378 = vmatprep.subr.bf16.mxu0 0
      %379 = vmatpush1.bf16.msra.mxu0 %v358
      %380 = vmatprep.subr.bf16.mxu0 0
      %381 = vmatpush1.bf16.msra.mxu0 %v359
      %382 = vmatprep.subr.bf16.mxu0 0
      %383 = vmatpush1.bf16.msra.mxu0 %v360
      %384 = vmatprep.subr.bf16.mxu0 0
      %385 = vmatpush1.bf16.msra.mxu0 %v361
      %386 = vmatprep.subr.bf16.mxu0 0
      %387 = vmatpush1.bf16.msra.mxu0 0
      %388 = vmatprep.subr.bf16.mxu0 0
      %389 = vmatpush1.bf16.msra.mxu0 0
      %390 = vmatprep.subr.bf16.mxu0 0
      %391 = vmatpush1.bf16.msra.mxu0 0
      %392 = vmatprep.subr.bf16.mxu0 0
      %393 = vmatpush1.bf16.msra.mxu0 0
      %394 = vmatprep.subr.bf16.mxu0 0
      %395 = vmatpush1.bf16.msra.mxu0 0
      %396 = vmatprep.subr.bf16.mxu0 0
      %397 = vmatpush1.bf16.msra.mxu0 0
      %398 = vmatprep.subr.bf16.mxu0 0
      %399 = vmatpush1.bf16.msra.mxu0 0
      %400 = vmatprep.subr.bf16.mxu0 0
      %401 = vmatpush1.bf16.msra.mxu0 0
      %402 = vmatprep.mubr.bf16.mxu0 0
      %403 = vmatmul.mubr.bf16.gmra.mrb[0].mxu0 %v306
      %v404 = vpop.f32.mrb[0].mxu0
      %v405 = vadd.f32 0.0, %v404
      %v406 = vpop.f32.mrb[0].mxu0
      %v407 = vpop.f32.mrb[0].mxu0
      %v408 = vadd.f32 0.0, %v407
      %v409 = vpop.f32.mrb[0].mxu0
      %410 = vmatprep.mubr.bf16.mxu0 0
      %411 = vmatmul.mubr.bf16.gmra.mrb[0].mxu0 %v307
      %v412 = vpop.f32.mrb[0].mxu0
      %v413 = vadd.f32 0.0, %v412
      %v414 = vpop.f32.mrb[0].mxu0
      %v415 = vpop.f32.mrb[0].mxu0
      %v416 = vadd.f32 0.0, %v415
      %v417 = vpop.f32.mrb[0].mxu0
      %418 = vmatprep.mubr.bf16.mxu0 0
      %419 = vmatmul.mubr.bf16.gmra.mrb[0].mxu0 %v308
      %v420 = vpop.f32.mrb[0].mxu0
      %v421 = vadd.f32 0.0, %v420
      %v422 = vpop.f32.mrb[0].mxu0
      %v423 = vpop.f32.mrb[0].mxu0
      %v424 = vadd.f32 0.0, %v423
      %v425 = vpop.f32.mrb[0].mxu0
      %426 = vmatprep.mubr.bf16.mxu0 0
      %427 = vmatmul.mubr.bf16.gmra.mrb[0].mxu0 %v309
      %v428 = vpop.f32.mrb[0].mxu0
      %v429 = vadd.f32 0.0, %v428
      %v430 = vpop.f32.mrb[0].mxu0
      %v431 = vpop.f32.mrb[0].mxu0
      %v432 = vadd.f32 0.0, %v431
      %v433 = vpop.f32.mrb[0].mxu0
      %434 = vmatprep.mubr.bf16.mxu0 0
      %435 = vmatmul.mubr.bf16.gmra.mrb[0].mxu0 %v310
      %v436 = vpop.f32.mrb[0].mxu0
      %v437 = vadd.f32 0.0, %v436
      %v438 = vpop.f32.mrb[0].mxu0
      %v439 = vpop.f32.mrb[0].mxu0
      %v440 = vadd.f32 0.0, %v439
      %v441 = vpop.f32.mrb[0].mxu0
      %442 = vmatprep.mubr.bf16.mxu0 0
      %443 = vmatmul.mubr.bf16.gmra.mrb[0].mxu0 %v311
      %v444 = vpop.f32.mrb[0].mxu0
      %v445 = vadd.f32 0.0, %v444
      %v446 = vpop.f32.mrb[0].mxu0
      %v447 = vpop.f32.mrb[0].mxu0
      %v448 = vadd.f32 0.0, %v447
      %v449 = vpop.f32.mrb[0].mxu0
      %450 = vmatprep.mubr.bf16.mxu0 0
      %451 = vmatmul.mubr.bf16.gmra.mrb[0].mxu0 %v312
      %v452 = vpop.f32.mrb[0].mxu0
      %v453 = vadd.f32 0.0, %v452
      %v454 = vpop.f32.mrb[0].mxu0
      %v455 = vpop.f32.mrb[0].mxu0
      %v456 = vadd.f32 0.0, %v455
      %v457 = vpop.f32.mrb[0].mxu0
      %458 = vmatprep.mubr.bf16.mxu0 0
      %459 = vmatmul.mubr.bf16.gmra.mrb[0].mxu0 %v313
      %v460 = vpop.f32.mrb[0].mxu0
      %v461 = vadd.f32 0.0, %v460
      %v462 = vpop.f32.mrb[0].mxu0
      %v463 = vpop.f32.mrb[0].mxu0
      %v464 = vadd.f32 0.0, %v463
      %v465 = vpop.f32.mrb[0].mxu0
      %466 = vdwg.mxu0
      %v467 = vld [vmem:[%s4] sm:$0x1]
      %v469 = vlaneseq
      %v470 = vshrl.u32 %v469, 7
      %v471 = vsub.s32 0, %v470
      %v472 = vrot.slane %v467, %v471
      %474 = vmatprep.subr.mxu0 0.0
      %475 = vmatpush1.msra.mxu0 %v405
      %476 = vmatprep.subr.mxu0 0.0
      %477 = vmatpush1.msra.mxu0 %v408
      %478 = vmatprep.subr.mxu0 0.0
      %479 = vmatpush1.msra.mxu0 %v413
      %480 = vmatprep.subr.mxu0 0.0
      %481 = vmatpush1.msra.mxu0 %v416
      %482 = vmatprep.subr.mxu0 0.0
      %483 = vmatpush1.msra.mxu0 %v421
      %484 = vmatprep.subr.mxu0 0.0
      %485 = vmatpush1.msra.mxu0 %v424
      %486 = vmatprep.subr.mxu0 0.0
      %487 = vmatpush1.msra.mxu0 %v429
      %488 = vmatprep.subr.mxu0 0.0
      %489 = vmatpush1.msra.mxu0 %v432
      %490 = vmatprep.subr.mxu0 0.0
      %491 = vmatpush1.msra.mxu0 %v437
      %492 = vmatprep.subr.mxu0 0.0
      %493 = vmatpush1.msra.mxu0 %v440
      %494 = vmatprep.subr.mxu0 0.0
      %495 = vmatpush1.msra.mxu0 %v445
      %496 = vmatprep.subr.mxu0 0.0
      %497 = vmatpush1.msra.mxu0 %v448
      %498 = vmatprep.subr.mxu0 0.0
      %499 = vmatpush1.msra.mxu0 %v453
      %500 = vmatprep.subr.mxu0 0.0
      %501 = vmatpush1.msra.mxu0 %v456
      %502 = vmatprep.subr.mxu0 0.0
      %503 = vmatpush1.msra.mxu0 %v461
      %504 = vmatprep.subr.mxu0 0.0
      %505 = vmatpush1.msra.mxu0 %v464
      %506 = vmatprep.subr.mxu0 0.0
      %507 = vmatpush1.msra.mxu0 0.0
      %508 = vmatprep.subr.mxu0 0.0
      %509 = vmatpush1.msra.mxu0 0.0
      %510 = vmatprep.subr.mxu0 0.0
      %511 = vmatpush1.msra.mxu0 0.0
      %512 = vmatprep.subr.mxu0 0.0
      %513 = vmatpush1.msra.mxu0 0.0
      %514 = vmatprep.subr.mxu0 0.0
      %515 = vmatpush1.msra.mxu0 0.0
      %516 = vmatprep.subr.mxu0 0.0
      %517 = vmatpush1.msra.mxu0 0.0
      %518 = vmatprep.subr.mxu0 0.0
      %519 = vmatpush1.msra.mxu0 0.0
      %520 = vmatprep.subr.mxu0 0.0
      %521 = vmatpush1.msra.mxu0 0.0
      %522 = vmatprep.subr.mxu0 0.0
      %523 = vmatpush1.msra.mxu0 0.0
      %524 = vmatprep.subr.mxu0 0.0
      %525 = vmatpush1.msra.mxu0 0.0
      %526 = vmatprep.subr.mxu0 0.0
      %527 = vmatpush1.msra.mxu0 0.0
      %528 = vmatprep.subr.mxu0 0.0
      %529 = vmatpush1.msra.mxu0 0.0
      %530 = vmatprep.subr.mxu0 0.0
      %531 = vmatpush1.msra.mxu0 0.0
      %532 = vmatprep.subr.mxu0 0.0
      %533 = vmatpush1.msra.mxu0 0.0
      %534 = vmatprep.subr.mxu0 0.0
      %535 = vmatpush1.msra.mxu0 0.0
      %536 = vmatprep.subr.mxu0 0.0
      %537 = vmatpush1.msra.mxu0 0.0
      %538 = vmatprep.mubr.f32.mxu0 0.0
      %539 = vmatmul.mubr.f32.gmra.mrb[0].mxu0 %v226
      %v540 = vpop.f32.mrb[0].mxu0
      %v541 = vadd.f32 %v472, %v540
      %v542 = vpop.f32.mrb[0].mxu0
      %543 = vmatprep.mubr.f32.mxu0 0.0
      %544 = vmatmul.mubr.f32.gmra.mrb[0].mxu0 %v227
      %v545 = vpop.f32.mrb[0].mxu0
      %v546 = vadd.f32 %v472, %v545
      %v547 = vpop.f32.mrb[0].mxu0
      %548 = vmatprep.mubr.f32.mxu0 0.0
      %549 = vmatmul.mubr.f32.gmra.mrb[0].mxu0 %v228
      %v550 = vpop.f32.mrb[0].mxu0
      %v551 = vadd.f32 %v472, %v550
      %v552 = vpop.f32.mrb[0].mxu0
      %553 = vmatprep.mubr.f32.mxu0 0.0
      %554 = vmatmul.mubr.f32.gmra.mrb[0].mxu0 %v229
      %v555 = vpop.f32.mrb[0].mxu0
      %v556 = vadd.f32 %v472, %v555
      %v557 = vpop.f32.mrb[0].mxu0
      %558 = vmatprep.mubr.f32.mxu0 0.0
      %559 = vmatmul.mubr.f32.gmra.mrb[0].mxu0 %v230
      %v560 = vpop.f32.mrb[0].mxu0
      %v561 = vadd.f32 %v472, %v560
      %v562 = vpop.f32.mrb[0].mxu0
      %563 = vmatprep.mubr.f32.mxu0 0.0
      %564 = vmatmul.mubr.f32.gmra.mrb[0].mxu0 %v231
      %v565 = vpop.f32.mrb[0].mxu0
      %v566 = vadd.f32 %v472, %v565
      %v567 = vpop.f32.mrb[0].mxu0
      %568 = vmatprep.mubr.f32.mxu0 0.0
      %569 = vmatmul.mubr.f32.gmra.mrb[0].mxu0 %v232
      %v570 = vpop.f32.mrb[0].mxu0
      %v571 = vadd.f32 %v472, %v570
      %v572 = vpop.f32.mrb[0].mxu0
      %573 = vmatprep.mubr.f32.mxu0 0.0
      %574 = vmatmul.mubr.f32.gmra.mrb[0].mxu0 %v233
      %v575 = vpop.f32.mrb[0].mxu0
      %v576 = vadd.f32 %v472, %v575
      %v577 = vpop.f32.mrb[0].mxu0
      %578 = vmatprep.mubr.f32.mxu0 0.0
      %579 = vmatmul.mubr.f32.gmra.mrb[0].mxu0 %v234
      %v580 = vpop.f32.mrb[0].mxu0
      %v581 = vadd.f32 %v472, %v580
      %v582 = vpop.f32.mrb[0].mxu0
      %583 = vmatprep.mubr.f32.mxu0 0.0
      %584 = vmatmul.mubr.f32.gmra.mrb[0].mxu0 %v235
      %v585 = vpop.f32.mrb[0].mxu0
      %v586 = vadd.f32 %v472, %v585
      %v587 = vpop.f32.mrb[0].mxu0
      %588 = vmatprep.mubr.f32.mxu0 0.0
      %589 = vmatmul.mubr.f32.gmra.mrb[0].mxu0 %v236
      %v590 = vpop.f32.mrb[0].mxu0
      %v591 = vadd.f32 %v472, %v590
      %v592 = vpop.f32.mrb[0].mxu0
      %593 = vmatprep.mubr.f32.mxu0 0.0
      %594 = vmatmul.mubr.f32.gmra.mrb[0].mxu0 %v237
      %v595 = vpop.f32.mrb[0].mxu0
      %v596 = vadd.f32 %v472, %v595
      %v597 = vpop.f32.mrb[0].mxu0
      %598 = vmatprep.mubr.f32.mxu0 0.0
      %599 = vmatmul.mubr.f32.gmra.mrb[0].mxu0 %v238
      %v600 = vpop.f32.mrb[0].mxu0
      %v601 = vadd.f32 %v472, %v600
      %v602 = vpop.f32.mrb[0].mxu0
      %603 = vmatprep.mubr.f32.mxu0 0.0
      %604 = vmatmul.mubr.f32.gmra.mrb[0].mxu0 %v239
      %v605 = vpop.f32.mrb[0].mxu0
      %v606 = vadd.f32 %v472, %v605
      %v607 = vpop.f32.mrb[0].mxu0
      %608 = vmatprep.mubr.f32.mxu0 0.0
      %609 = vmatmul.mubr.f32.gmra.mrb[0].mxu0 %v240
      %v610 = vpop.f32.mrb[0].mxu0
      %v611 = vadd.f32 %v472, %v610
      %v612 = vpop.f32.mrb[0].mxu0
      %613 = vmatprep.mubr.f32.mxu0 0.0
      %614 = vmatmul.mubr.f32.gmra.mrb[0].mxu0 %v241
      %v615 = vpop.f32.mrb[0].mxu0
      %v616 = vadd.f32 %v472, %v615
      %v617 = vpop.f32.mrb[0].mxu0
      %618 = vdwg.mxu0
      %v619 = vmax.f32 %v541, 0.0
      %v620 = vmax.f32 %v546, 0.0
      %v621 = vmax.f32 %v551, 0.0
      %v622 = vmax.f32 %v556, 0.0
      %v623 = vmax.f32 %v561, 0.0
      %v624 = vmax.f32 %v566, 0.0
      %v625 = vmax.f32 %v571, 0.0
      %v626 = vmax.f32 %v576, 0.0
      %v627 = vmax.f32 %v581, 0.0
      %v628 = vmax.f32 %v586, 0.0
      %v629 = vmax.f32 %v591, 0.0
      %v630 = vmax.f32 %v596, 0.0
      %v631 = vmax.f32 %v601, 0.0
      %v632 = vmax.f32 %v606, 0.0
      %v633 = vmax.f32 %v611, 0.0
      %v634 = vmax.f32 %v616, 0.0
      %v635 = vpack.c.bf16 %v620, %v619
      %v636 = vpack.c.bf16 %v622, %v621
      %v637 = vpack.c.bf16 %v624, %v623
      %v638 = vpack.c.bf16 %v626, %v625
      %v639 = vpack.c.bf16 %v628, %v627
      %v640 = vpack.c.bf16 %v630, %v629
      %v641 = vpack.c.bf16 %v632, %v631
      %v642 = vpack.c.bf16 %v634, %v633
      %s643 = scalar_lea.vmem %s3, 64
      %v644 = vld [vmem:[%s643] sm:$0xf]
      %v645 = vld [vmem:[%s643 + $0x4] sm:$0xf]
      %v646 = vld [vmem:[%s643 + $0x8] sm:$0xf]
      %v647 = vld [vmem:[%s643 + $0xc] sm:$0xf]
      %v648 = vld [vmem:[%s643 + $0x10] sm:$0xf]
      %v649 = vld [vmem:[%s643 + $0x14] sm:$0xf]
      %v650 = vld [vmem:[%s643 + $0x18] sm:$0xf]
      %v651 = vld [vmem:[%s643 + $0x1c] sm:$0xf]
      %v652 = vld [vmem:[%s643 + $0x20] sm:$0xf]
      %v653 = vld [vmem:[%s643 + $0x24] sm:$0xf]
      %v654 = vld [vmem:[%s643 + $0x28] sm:$0xf]
      %v655 = vld [vmem:[%s643 + $0x2c] sm:$0xf]
      %v656 = vld [vmem:[%s643 + $0x30] sm:$0xf]
      %v657 = vld [vmem:[%s643 + $0x34] sm:$0xf]
      %v658 = vld [vmem:[%s643 + $0x38] sm:$0xf]
      %v659 = vld [vmem:[%s643 + $0x3c] sm:$0xf]
      %v676 = vunpack.c.l.b16 %v644
      %v677 = vunpack.c.l.b16 %v645
      %v678 = vunpack.c.l.b16 %v646
      %v679 = vunpack.c.l.b16 %v647
      %v680 = vunpack.c.l.b16 %v648
      %v681 = vunpack.c.l.b16 %v649
      %v682 = vunpack.c.l.b16 %v650
      %v683 = vunpack.c.l.b16 %v651
      %v684 = vunpack.c.l.b16 %v652
      %v685 = vunpack.c.l.b16 %v653
      %v686 = vunpack.c.l.b16 %v654
      %v687 = vunpack.c.l.b16 %v655
      %v688 = vunpack.c.l.b16 %v656
      %v689 = vunpack.c.l.b16 %v657
      %v690 = vunpack.c.l.b16 %v658
      %v691 = vunpack.c.l.b16 %v659
      %v692 = vpack.c.b16 %v677, %v676
      %v693 = vpack.c.b16 %v679, %v678
      %v694 = vpack.c.b16 %v681, %v680
      %v695 = vpack.c.b16 %v683, %v682
      %v696 = vpack.c.b16 %v685, %v684
      %v697 = vpack.c.b16 %v687, %v686
      %v698 = vpack.c.b16 %v689, %v688
      %v699 = vpack.c.b16 %v691, %v690
      %708 = vmatprep.subr.bf16.mxu0 0
      %709 = vmatpush1.bf16.msra.mxu0 %v692
      %710 = vmatprep.subr.bf16.mxu0 0
      %711 = vmatpush1.bf16.msra.mxu0 %v693
      %712 = vmatprep.subr.bf16.mxu0 0
      %713 = vmatpush1.bf16.msra.mxu0 %v694
      %714 = vmatprep.subr.bf16.mxu0 0
      %715 = vmatpush1.bf16.msra.mxu0 %v695
      %716 = vmatprep.subr.bf16.mxu0 0
      %717 = vmatpush1.bf16.msra.mxu0 %v696
      %718 = vmatprep.subr.bf16.mxu0 0
      %719 = vmatpush1.bf16.msra.mxu0 %v697
      %720 = vmatprep.subr.bf16.mxu0 0
      %721 = vmatpush1.bf16.msra.mxu0 %v698
      %722 = vmatprep.subr.bf16.mxu0 0
      %723 = vmatpush1.bf16.msra.mxu0 %v699
      %724 = vmatprep.subr.bf16.mxu0 0
      %725 = vmatpush1.bf16.msra.mxu0 0
      %726 = vmatprep.subr.bf16.mxu0 0
      %727 = vmatpush1.bf16.msra.mxu0 0
      %728 = vmatprep.subr.bf16.mxu0 0
      %729 = vmatpush1.bf16.msra.mxu0 0
      %730 = vmatprep.subr.bf16.mxu0 0
      %731 = vmatpush1.bf16.msra.mxu0 0
      %732 = vmatprep.subr.bf16.mxu0 0
      %733 = vmatpush1.bf16.msra.mxu0 0
      %734 = vmatprep.subr.bf16.mxu0 0
      %735 = vmatpush1.bf16.msra.mxu0 0
      %736 = vmatprep.subr.bf16.mxu0 0
      %737 = vmatpush1.bf16.msra.mxu0 0
      %738 = vmatprep.subr.bf16.mxu0 0
      %739 = vmatpush1.bf16.msra.mxu0 0
      %740 = vmatprep.mubr.bf16.mxu0 0
      %741 = vmatmul.mubr.bf16.gmra.mrb[0].mxu0 %v635
      %v742 = vpop.f32.mrb[0].mxu0
      %v743 = vadd.f32 0.0, %v742
      %v744 = vpop.f32.mrb[0].mxu0
      %v745 = vpop.f32.mrb[0].mxu0
      %v746 = vadd.f32 0.0, %v745
      %v747 = vpop.f32.mrb[0].mxu0
      %748 = vmatprep.mubr.bf16.mxu0 0
      %749 = vmatmul.mubr.bf16.gmra.mrb[0].mxu0 %v636
      %v750 = vpop.f32.mrb[0].mxu0
      %v751 = vadd.f32 0.0, %v750
      %v752 = vpop.f32.mrb[0].mxu0
      %v753 = vpop.f32.mrb[0].mxu0
      %v754 = vadd.f32 0.0, %v753
      %v755 = vpop.f32.mrb[0].mxu0
      %756 = vmatprep.mubr.bf16.mxu0 0
      %757 = vmatmul.mubr.bf16.gmra.mrb[0].mxu0 %v637
      %v758 = vpop.f32.mrb[0].mxu0
      %v759 = vadd.f32 0.0, %v758
      %v760 = vpop.f32.mrb[0].mxu0
      %v761 = vpop.f32.mrb[0].mxu0
      %v762 = vadd.f32 0.0, %v761
      %v763 = vpop.f32.mrb[0].mxu0
      %764 = vmatprep.mubr.bf16.mxu0 0
      %765 = vmatmul.mubr.bf16.gmra.mrb[0].mxu0 %v638
      %v766 = vpop.f32.mrb[0].mxu0
      %v767 = vadd.f32 0.0, %v766
      %v768 = vpop.f32.mrb[0].mxu0
      %v769 = vpop.f32.mrb[0].mxu0
      %v770 = vadd.f32 0.0, %v769
      %v771 = vpop.f32.mrb[0].mxu0
      %772 = vmatprep.mubr.bf16.mxu0 0
      %773 = vmatmul.mubr.bf16.gmra.mrb[0].mxu0 %v639
      %v774 = vpop.f32.mrb[0].mxu0
      %v775 = vadd.f32 0.0, %v774
      %v776 = vpop.f32.mrb[0].mxu0
      %v777 = vpop.f32.mrb[0].mxu0
      %v778 = vadd.f32 0.0, %v777
      %v779 = vpop.f32.mrb[0].mxu0
      %780 = vmatprep.mubr.bf16.mxu0 0
      %781 = vmatmul.mubr.bf16.gmra.mrb[0].mxu0 %v640
      %v782 = vpop.f32.mrb[0].mxu0
      %v783 = vadd.f32 0.0, %v782
      %v784 = vpop.f32.mrb[0].mxu0
      %v785 = vpop.f32.mrb[0].mxu0
      %v786 = vadd.f32 0.0, %v785
      %v787 = vpop.f32.mrb[0].mxu0
      %788 = vmatprep.mubr.bf16.mxu0 0
      %789 = vmatmul.mubr.bf16.gmra.mrb[0].mxu0 %v641
      %v790 = vpop.f32.mrb[0].mxu0
      %v791 = vadd.f32 0.0, %v790
      %v792 = vpop.f32.mrb[0].mxu0
      %v793 = vpop.f32.mrb[0].mxu0
      %v794 = vadd.f32 0.0, %v793
      %v795 = vpop.f32.mrb[0].mxu0
      %796 = vmatprep.mubr.bf16.mxu0 0
      %797 = vmatmul.mubr.bf16.gmra.mrb[0].mxu0 %v642
      %v798 = vpop.f32.mrb[0].mxu0
      %v799 = vadd.f32 0.0, %v798
      %v800 = vpop.f32.mrb[0].mxu0
      %v801 = vpop.f32.mrb[0].mxu0
      %v802 = vadd.f32 0.0, %v801
      %v803 = vpop.f32.mrb[0].mxu0
      %804 = vdwg.mxu0
      %s805 = scalar_lea.vmem %s4, 1
      %v806 = vld [vmem:[%s805] sm:$0x1]
      %v808 = vlaneseq
      %v809 = vshrl.u32 %v808, 7
      %v810 = vsub.s32 0, %v809
      %v811 = vrot.slane %v806, %v810
      %813 = vmatprep.subr.mxu0 0.0
      %814 = vmatpush1.msra.mxu0 %v743
      %815 = vmatprep.subr.mxu0 0.0
      %816 = vmatpush1.msra.mxu0 %v746
      %817 = vmatprep.subr.mxu0 0.0
      %818 = vmatpush1.msra.mxu0 %v751
      %819 = vmatprep.subr.mxu0 0.0
      %820 = vmatpush1.msra.mxu0 %v754
      %821 = vmatprep.subr.mxu0 0.0
      %822 = vmatpush1.msra.mxu0 %v759
      %823 = vmatprep.subr.mxu0 0.0
      %824 = vmatpush1.msra.mxu0 %v762
      %825 = vmatprep.subr.mxu0 0.0
      %826 = vmatpush1.msra.mxu0 %v767
      %827 = vmatprep.subr.mxu0 0.0
      %828 = vmatpush1.msra.mxu0 %v770
      %829 = vmatprep.subr.mxu0 0.0
      %830 = vmatpush1.msra.mxu0 %v775
      %831 = vmatprep.subr.mxu0 0.0
      %832 = vmatpush1.msra.mxu0 %v778
      %833 = vmatprep.subr.mxu0 0.0
      %834 = vmatpush1.msra.mxu0 %v783
      %835 = vmatprep.subr.mxu0 0.0
      %836 = vmatpush1.msra.mxu0 %v786
      %837 = vmatprep.subr.mxu0 0.0
      %838 = vmatpush1.msra.mxu0 %v791
      %839 = vmatprep.subr.mxu0 0.0
      %840 = vmatpush1.msra.mxu0 %v794
      %841 = vmatprep.subr.mxu0 0.0
      %842 = vmatpush1.msra.mxu0 %v799
      %843 = vmatprep.subr.mxu0 0.0
      %844 = vmatpush1.msra.mxu0 %v802
      %845 = vmatprep.subr.mxu0 0.0
      %846 = vmatpush1.msra.mxu0 0.0
      %847 = vmatprep.subr.mxu0 0.0
      %848 = vmatpush1.msra.mxu0 0.0
      %849 = vmatprep.subr.mxu0 0.0
      %850 = vmatpush1.msra.mxu0 0.0
      %851 = vmatprep.subr.mxu0 0.0
      %852 = vmatpush1.msra.mxu0 0.0
      %853 = vmatprep.subr.mxu0 0.0
      %854 = vmatpush1.msra.mxu0 0.0
      %855 = vmatprep.subr.mxu0 0.0
      %856 = vmatpush1.msra.mxu0 0.0
      %857 = vmatprep.subr.mxu0 0.0
      %858 = vmatpush1.msra.mxu0 0.0
      %859 = vmatprep.subr.mxu0 0.0
      %860 = vmatpush1.msra.mxu0 0.0
      %861 = vmatprep.subr.mxu0 0.0
      %862 = vmatpush1.msra.mxu0 0.0
      %863 = vmatprep.subr.mxu0 0.0
      %864 = vmatpush1.msra.mxu0 0.0
      %865 = vmatprep.subr.mxu0 0.0
      %866 = vmatpush1.msra.mxu0 0.0
      %867 = vmatprep.subr.mxu0 0.0
      %868 = vmatpush1.msra.mxu0 0.0
      %869 = vmatprep.subr.mxu0 0.0
      %870 = vmatpush1.msra.mxu0 0.0
      %871 = vmatprep.subr.mxu0 0.0
      %872 = vmatpush1.msra.mxu0 0.0
      %873 = vmatprep.subr.mxu0 0.0
      %874 = vmatpush1.msra.mxu0 0.0
      %875 = vmatprep.subr.mxu0 0.0
      %876 = vmatpush1.msra.mxu0 0.0
      %877 = vmatprep.mubr.f32.mxu0 0.0
      %878 = vmatmul.mubr.f32.gmra.mrb[0].mxu0 %v226
      %v879 = vpop.f32.mrb[0].mxu0
      %v880 = vadd.f32 %v811, %v879
      %v881 = vpop.f32.mrb[0].mxu0
      %882 = vmatprep.mubr.f32.mxu0 0.0
      %883 = vmatmul.mubr.f32.gmra.mrb[0].mxu0 %v227
      %v884 = vpop.f32.mrb[0].mxu0
      %v885 = vadd.f32 %v811, %v884
      %v886 = vpop.f32.mrb[0].mxu0
      %887 = vmatprep.mubr.f32.mxu0 0.0
      %888 = vmatmul.mubr.f32.gmra.mrb[0].mxu0 %v228
      %v889 = vpop.f32.mrb[0].mxu0
      %v890 = vadd.f32 %v811, %v889
      %v891 = vpop.f32.mrb[0].mxu0
      %892 = vmatprep.mubr.f32.mxu0 0.0
      %893 = vmatmul.mubr.f32.gmra.mrb[0].mxu0 %v229
      %v894 = vpop.f32.mrb[0].mxu0
      %v895 = vadd.f32 %v811, %v894
      %v896 = vpop.f32.mrb[0].mxu0
      %897 = vmatprep.mubr.f32.mxu0 0.0
      %898 = vmatmul.mubr.f32.gmra.mrb[0].mxu0 %v230
      %v899 = vpop.f32.mrb[0].mxu0
      %v900 = vadd.f32 %v811, %v899
      %v901 = vpop.f32.mrb[0].mxu0
      %902 = vmatprep.mubr.f32.mxu0 0.0
      %903 = vmatmul.mubr.f32.gmra.mrb[0].mxu0 %v231
      %v904 = vpop.f32.mrb[0].mxu0
      %v905 = vadd.f32 %v811, %v904
      %v906 = vpop.f32.mrb[0].mxu0
      %907 = vmatprep.mubr.f32.mxu0 0.0
      %908 = vmatmul.mubr.f32.gmra.mrb[0].mxu0 %v232
      %v909 = vpop.f32.mrb[0].mxu0
      %v910 = vadd.f32 %v811, %v909
      %v911 = vpop.f32.mrb[0].mxu0
      %912 = vmatprep.mubr.f32.mxu0 0.0
      %913 = vmatmul.mubr.f32.gmra.mrb[0].mxu0 %v233
      %v914 = vpop.f32.mrb[0].mxu0
      %v915 = vadd.f32 %v811, %v914
      %v916 = vpop.f32.mrb[0].mxu0
      %917 = vmatprep.mubr.f32.mxu0 0.0
      %918 = vmatmul.mubr.f32.gmra.mrb[0].mxu0 %v234
      %v919 = vpop.f32.mrb[0].mxu0
      %v920 = vadd.f32 %v811, %v919
      %v921 = vpop.f32.mrb[0].mxu0
      %922 = vmatprep.mubr.f32.mxu0 0.0
      %923 = vmatmul.mubr.f32.gmra.mrb[0].mxu0 %v235
      %v924 = vpop.f32.mrb[0].mxu0
      %v925 = vadd.f32 %v811, %v924
      %v926 = vpop.f32.mrb[0].mxu0
      %927 = vmatprep.mubr.f32.mxu0 0.0
      %928 = vmatmul.mubr.f32.gmra.mrb[0].mxu0 %v236
      %v929 = vpop.f32.mrb[0].mxu0
      %v930 = vadd.f32 %v811, %v929
      %v931 = vpop.f32.mrb[0].mxu0
      %932 = vmatprep.mubr.f32.mxu0 0.0
      %933 = vmatmul.mubr.f32.gmra.mrb[0].mxu0 %v237
      %v934 = vpop.f32.mrb[0].mxu0
      %v935 = vadd.f32 %v811, %v934
      %v936 = vpop.f32.mrb[0].mxu0
      %937 = vmatprep.mubr.f32.mxu0 0.0
      %938 = vmatmul.mubr.f32.gmra.mrb[0].mxu0 %v238
      %v939 = vpop.f32.mrb[0].mxu0
      %v940 = vadd.f32 %v811, %v939
      %v941 = vpop.f32.mrb[0].mxu0
      %942 = vmatprep.mubr.f32.mxu0 0.0
      %943 = vmatmul.mubr.f32.gmra.mrb[0].mxu0 %v239
      %v944 = vpop.f32.mrb[0].mxu0
      %v945 = vadd.f32 %v811, %v944
      %v946 = vpop.f32.mrb[0].mxu0
      %947 = vmatprep.mubr.f32.mxu0 0.0
      %948 = vmatmul.mubr.f32.gmra.mrb[0].mxu0 %v240
      %v949 = vpop.f32.mrb[0].mxu0
      %v950 = vadd.f32 %v811, %v949
      %v951 = vpop.f32.mrb[0].mxu0
      %952 = vmatprep.mubr.f32.mxu0 0.0
      %953 = vmatmul.mubr.f32.gmra.mrb[0].mxu0 %v241
      %v954 = vpop.f32.mrb[0].mxu0
      %v955 = vadd.f32 %v811, %v954
      %v956 = vpop.f32.mrb[0].mxu0
      %957 = vdwg.mxu0
      %v958 = vmax.f32 %v880, 0.0
      %v959 = vmax.f32 %v885, 0.0
      %v960 = vmax.f32 %v890, 0.0
      %v961 = vmax.f32 %v895, 0.0
      %v962 = vmax.f32 %v900, 0.0
      %v963 = vmax.f32 %v905, 0.0
      %v964 = vmax.f32 %v910, 0.0
      %v965 = vmax.f32 %v915, 0.0
      %v966 = vmax.f32 %v920, 0.0
      %v967 = vmax.f32 %v925, 0.0
      %v968 = vmax.f32 %v930, 0.0
      %v969 = vmax.f32 %v935, 0.0
      %v970 = vmax.f32 %v940, 0.0
      %v971 = vmax.f32 %v945, 0.0
      %v972 = vmax.f32 %v950, 0.0
      %v973 = vmax.f32 %v955, 0.0
      %v974 = vpack.c.bf16 %v959, %v958
      %v975 = vpack.c.bf16 %v961, %v960
      %v976 = vpack.c.bf16 %v963, %v962
      %v977 = vpack.c.bf16 %v965, %v964
      %v978 = vpack.c.bf16 %v967, %v966
      %v979 = vpack.c.bf16 %v969, %v968
      %v980 = vpack.c.bf16 %v971, %v970
      %v981 = vpack.c.bf16 %v973, %v972
      %s982 = scalar_lea.vmem %s3, 128
      %v983 = vld [vmem:[%s982] sm:$0xf]
      %v984 = vld [vmem:[%s982 + $0x4] sm:$0xf]
      %v985 = vld [vmem:[%s982 + $0x8] sm:$0xf]
      %v986 = vld [vmem:[%s982 + $0xc] sm:$0xf]
      %v987 = vld [vmem:[%s982 + $0x10] sm:$0xf]
      %v988 = vld [vmem:[%s982 + $0x14] sm:$0xf]
      %v989 = vld [vmem:[%s982 + $0x18] sm:$0xf]
      %v990 = vld [vmem:[%s982 + $0x1c] sm:$0xf]
      %v991 = vld [vmem:[%s982 + $0x20] sm:$0xf]
      %v992 = vld [vmem:[%s982 + $0x24] sm:$0xf]
      %v993 = vld [vmem:[%s982 + $0x28] sm:$0xf]
      %v994 = vld [vmem:[%s982 + $0x2c] sm:$0xf]
      %v995 = vld [vmem:[%s982 + $0x30] sm:$0xf]
      %v996 = vld [vmem:[%s982 + $0x34] sm:$0xf]
      %v997 = vld [vmem:[%s982 + $0x38] sm:$0xf]
      %v998 = vld [vmem:[%s982 + $0x3c] sm:$0xf]
      %v1015 = vunpack.c.l.b16 %v983
      %v1016 = vunpack.c.l.b16 %v984
      %v1017 = vunpack.c.l.b16 %v985
      %v1018 = vunpack.c.l.b16 %v986
      %v1019 = vunpack.c.l.b16 %v987
      %v1020 = vunpack.c.l.b16 %v988
      %v1021 = vunpack.c.l.b16 %v989
      %v1022 = vunpack.c.l.b16 %v990
      %v1023 = vunpack.c.l.b16 %v991
      %v1024 = vunpack.c.l.b16 %v992
      %v1025 = vunpack.c.l.b16 %v993
      %v1026 = vunpack.c.l.b16 %v994
      %v1027 = vunpack.c.l.b16 %v995
      %v1028 = vunpack.c.l.b16 %v996
      %v1029 = vunpack.c.l.b16 %v997
      %v1030 = vunpack.c.l.b16 %v998
      %v1031 = vpack.c.b16 %v1016, %v1015
      %v1032 = vpack.c.b16 %v1018, %v1017
      %v1033 = vpack.c.b16 %v1020, %v1019
      %v1034 = vpack.c.b16 %v1022, %v1021
      %v1035 = vpack.c.b16 %v1024, %v1023
      %v1036 = vpack.c.b16 %v1026, %v1025
      %v1037 = vpack.c.b16 %v1028, %v1027
      %v1038 = vpack.c.b16 %v1030, %v1029
      %1047 = vmatprep.subr.bf16.mxu0 0
      %1048 = vmatpush1.bf16.msra.mxu0 %v1031
      %1049 = vmatprep.subr.bf16.mxu0 0
      %1050 = vmatpush1.bf16.msra.mxu0 %v1032
      %1051 = vmatprep.subr.bf16.mxu0 0
      %1052 = vmatpush1.bf16.msra.mxu0 %v1033
      %1053 = vmatprep.subr.bf16.mxu0 0
      %1054 = vmatpush1.bf16.msra.mxu0 %v1034
      %1055 = vmatprep.subr.bf16.mxu0 0
      %1056 = vmatpush1.bf16.msra.mxu0 %v1035
      %1057 = vmatprep.subr.bf16.mxu0 0
      %1058 = vmatpush1.bf16.msra.mxu0 %v1036
      %1059 = vmatprep.subr.bf16.mxu0 0
      %1060 = vmatpush1.bf16.msra.mxu0 %v1037
      %1061 = vmatprep.subr.bf16.mxu0 0
      %1062 = vmatpush1.bf16.msra.mxu0 %v1038
      %1063 = vmatprep.subr.bf16.mxu0 0
      %1064 = vmatpush1.bf16.msra.mxu0 0
      %1065 = vmatprep.subr.bf16.mxu0 0
      %1066 = vmatpush1.bf16.msra.mxu0 0
      %1067 = vmatprep.subr.bf16.mxu0 0
      %1068 = vmatpush1.bf16.msra.mxu0 0
      %1069 = vmatprep.subr.bf16.mxu0 0
      %1070 = vmatpush1.bf16.msra.mxu0 0
      %1071 = vmatprep.subr.bf16.mxu0 0
      %1072 = vmatpush1.bf16.msra.mxu0 0
      %1073 = vmatprep.subr.bf16.mxu0 0
      %1074 = vmatpush1.bf16.msra.mxu0 0
      %1075 = vmatprep.subr.bf16.mxu0 0
      %1076 = vmatpush1.bf16.msra.mxu0 0
      %1077 = vmatprep.subr.bf16.mxu0 0
      %1078 = vmatpush1.bf16.msra.mxu0 0
      %1079 = vmatprep.mubr.bf16.mxu0 0
      %1080 = vmatmul.mubr.bf16.gmra.mrb[0].mxu0 %v974
      %v1081 = vpop.f32.mrb[0].mxu0
      %v1082 = vadd.f32 0.0, %v1081
      %v1083 = vpop.f32.mrb[0].mxu0
      %v1084 = vpop.f32.mrb[0].mxu0
      %v1085 = vadd.f32 0.0, %v1084
      %v1086 = vpop.f32.mrb[0].mxu0
      %1087 = vmatprep.mubr.bf16.mxu0 0
      %1088 = vmatmul.mubr.bf16.gmra.mrb[0].mxu0 %v975
      %v1089 = vpop.f32.mrb[0].mxu0
      %v1090 = vadd.f32 0.0, %v1089
      %v1091 = vpop.f32.mrb[0].mxu0
      %v1092 = vpop.f32.mrb[0].mxu0
      %v1093 = vadd.f32 0.0, %v1092
      %v1094 = vpop.f32.mrb[0].mxu0
      %1095 = vmatprep.mubr.bf16.mxu0 0
      %1096 = vmatmul.mubr.bf16.gmra.mrb[0].mxu0 %v976
      %v1097 = vpop.f32.mrb[0].mxu0
      %v1098 = vadd.f32 0.0, %v1097
      %v1099 = vpop.f32.mrb[0].mxu0
      %v1100 = vpop.f32.mrb[0].mxu0
      %v1101 = vadd.f32 0.0, %v1100
      %v1102 = vpop.f32.mrb[0].mxu0
      %1103 = vmatprep.mubr.bf16.mxu0 0
      %1104 = vmatmul.mubr.bf16.gmra.mrb[0].mxu0 %v977
      %v1105 = vpop.f32.mrb[0].mxu0
      %v1106 = vadd.f32 0.0, %v1105
      %v1107 = vpop.f32.mrb[0].mxu0
      %v1108 = vpop.f32.mrb[0].mxu0
      %v1109 = vadd.f32 0.0, %v1108
      %v1110 = vpop.f32.mrb[0].mxu0
      %1111 = vmatprep.mubr.bf16.mxu0 0
      %1112 = vmatmul.mubr.bf16.gmra.mrb[0].mxu0 %v978
      %v1113 = vpop.f32.mrb[0].mxu0
      %v1114 = vadd.f32 0.0, %v1113
      %v1115 = vpop.f32.mrb[0].mxu0
      %v1116 = vpop.f32.mrb[0].mxu0
      %v1117 = vadd.f32 0.0, %v1116
      %v1118 = vpop.f32.mrb[0].mxu0
      %1119 = vmatprep.mubr.bf16.mxu0 0
      %1120 = vmatmul.mubr.bf16.gmra.mrb[0].mxu0 %v979
      %v1121 = vpop.f32.mrb[0].mxu0
      %v1122 = vadd.f32 0.0, %v1121
      %v1123 = vpop.f32.mrb[0].mxu0
      %v1124 = vpop.f32.mrb[0].mxu0
      %v1125 = vadd.f32 0.0, %v1124
      %v1126 = vpop.f32.mrb[0].mxu0
      %1127 = vmatprep.mubr.bf16.mxu0 0
      %1128 = vmatmul.mubr.bf16.gmra.mrb[0].mxu0 %v980
      %v1129 = vpop.f32.mrb[0].mxu0
      %v1130 = vadd.f32 0.0, %v1129
      %v1131 = vpop.f32.mrb[0].mxu0
      %v1132 = vpop.f32.mrb[0].mxu0
      %v1133 = vadd.f32 0.0, %v1132
      %v1134 = vpop.f32.mrb[0].mxu0
      %1135 = vmatprep.mubr.bf16.mxu0 0
      %1136 = vmatmul.mubr.bf16.gmra.mrb[0].mxu0 %v981
      %v1137 = vpop.f32.mrb[0].mxu0
      %v1138 = vadd.f32 0.0, %v1137
      %v1139 = vpop.f32.mrb[0].mxu0
      %v1140 = vpop.f32.mrb[0].mxu0
      %v1141 = vadd.f32 0.0, %v1140
      %v1142 = vpop.f32.mrb[0].mxu0
      %1143 = vdwg.mxu0
      %s1144 = scalar_lea.vmem %s4, 2
      %v1145 = vld [vmem:[%s1144] sm:$0x1]
      %v1147 = vlaneseq
      %v1148 = vshrl.u32 %v1147, 7
      %v1149 = vsub.s32 0, %v1148
      %v1150 = vrot.slane %v1145, %v1149
      %1152 = vmatprep.subr.mxu0 0.0
      %1153 = vmatpush1.msra.mxu0 %v1082
      %1154 = vmatprep.subr.mxu0 0.0
      %1155 = vmatpush1.msra.mxu0 %v1085
      %1156 = vmatprep.subr.mxu0 0.0
      %1157 = vmatpush1.msra.mxu0 %v1090
      %1158 = vmatprep.subr.mxu0 0.0
      %1159 = vmatpush1.msra.mxu0 %v1093
      %1160 = vmatprep.subr.mxu0 0.0
      %1161 = vmatpush1.msra.mxu0 %v1098
      %1162 = vmatprep.subr.mxu0 0.0
      %1163 = vmatpush1.msra.mxu0 %v1101
      %1164 = vmatprep.subr.mxu0 0.0
      %1165 = vmatpush1.msra.mxu0 %v1106
      %1166 = vmatprep.subr.mxu0 0.0
      %1167 = vmatpush1.msra.mxu0 %v1109
      %1168 = vmatprep.subr.mxu0 0.0
      %1169 = vmatpush1.msra.mxu0 %v1114
      %1170 = vmatprep.subr.mxu0 0.0
      %1171 = vmatpush1.msra.mxu0 %v1117
      %1172 = vmatprep.subr.mxu0 0.0
      %1173 = vmatpush1.msra.mxu0 %v1122
      %1174 = vmatprep.subr.mxu0 0.0
      %1175 = vmatpush1.msra.mxu0 %v1125
      %1176 = vmatprep.subr.mxu0 0.0
      %1177 = vmatpush1.msra.mxu0 %v1130
      %1178 = vmatprep.subr.mxu0 0.0
      %1179 = vmatpush1.msra.mxu0 %v1133
      %1180 = vmatprep.subr.mxu0 0.0
      %1181 = vmatpush1.msra.mxu0 %v1138
      %1182 = vmatprep.subr.mxu0 0.0
      %1183 = vmatpush1.msra.mxu0 %v1141
      %1184 = vmatprep.subr.mxu0 0.0
      %1185 = vmatpush1.msra.mxu0 0.0
      %1186 = vmatprep.subr.mxu0 0.0
      %1187 = vmatpush1.msra.mxu0 0.0
      %1188 = vmatprep.subr.mxu0 0.0
      %1189 = vmatpush1.msra.mxu0 0.0
      %1190 = vmatprep.subr.mxu0 0.0
      %1191 = vmatpush1.msra.mxu0 0.0
      %1192 = vmatprep.subr.mxu0 0.0
      %1193 = vmatpush1.msra.mxu0 0.0
      %1194 = vmatprep.subr.mxu0 0.0
      %1195 = vmatpush1.msra.mxu0 0.0
      %1196 = vmatprep.subr.mxu0 0.0
      %1197 = vmatpush1.msra.mxu0 0.0
      %1198 = vmatprep.subr.mxu0 0.0
      %1199 = vmatpush1.msra.mxu0 0.0
      %1200 = vmatprep.subr.mxu0 0.0
      %1201 = vmatpush1.msra.mxu0 0.0
      %1202 = vmatprep.subr.mxu0 0.0
      %1203 = vmatpush1.msra.mxu0 0.0
      %1204 = vmatprep.subr.mxu0 0.0
      %1205 = vmatpush1.msra.mxu0 0.0
      %1206 = vmatprep.subr.mxu0 0.0
      %1207 = vmatpush1.msra.mxu0 0.0
      %1208 = vmatprep.subr.mxu0 0.0
      %1209 = vmatpush1.msra.mxu0 0.0
      %1210 = vmatprep.subr.mxu0 0.0
      %1211 = vmatpush1.msra.mxu0 0.0
      %1212 = vmatprep.subr.mxu0 0.0
      %1213 = vmatpush1.msra.mxu0 0.0
      %1214 = vmatprep.subr.mxu0 0.0
      %1215 = vmatpush1.msra.mxu0 0.0
      %1216 = vmatprep.mubr.f32.mxu0 0.0
      %1217 = vmatmul.mubr.f32.gmra.mrb[0].mxu0 %v226
      %v1218 = vpop.f32.mrb[0].mxu0
      %v1219 = vadd.f32 %v1150, %v1218
      %v1220 = vpop.f32.mrb[0].mxu0
      %1221 = vmatprep.mubr.f32.mxu0 0.0
      %1222 = vmatmul.mubr.f32.gmra.mrb[0].mxu0 %v227
      %v1223 = vpop.f32.mrb[0].mxu0
      %v1224 = vadd.f32 %v1150, %v1223
      %v1225 = vpop.f32.mrb[0].mxu0
      %1226 = vmatprep.mubr.f32.mxu0 0.0
      %1227 = vmatmul.mubr.f32.gmra.mrb[0].mxu0 %v228
      %v1228 = vpop.f32.mrb[0].mxu0
      %v1229 = vadd.f32 %v1150, %v1228
      %v1230 = vpop.f32.mrb[0].mxu0
      %1231 = vmatprep.mubr.f32.mxu0 0.0
      %1232 = vmatmul.mubr.f32.gmra.mrb[0].mxu0 %v229
      %v1233 = vpop.f32.mrb[0].mxu0
      %v1234 = vadd.f32 %v1150, %v1233
      %v1235 = vpop.f32.mrb[0].mxu0
      %1236 = vmatprep.mubr.f32.mxu0 0.0
      %1237 = vmatmul.mubr.f32.gmra.mrb[0].mxu0 %v230
      %v1238 = vpop.f32.mrb[0].mxu0
      %v1239 = vadd.f32 %v1150, %v1238
      %v1240 = vpop.f32.mrb[0].mxu0
      %1241 = vmatprep.mubr.f32.mxu0 0.0
      %1242 = vmatmul.mubr.f32.gmra.mrb[0].mxu0 %v231
      %v1243 = vpop.f32.mrb[0].mxu0
      %v1244 = vadd.f32 %v1150, %v1243
      %v1245 = vpop.f32.mrb[0].mxu0
      %1246 = vmatprep.mubr.f32.mxu0 0.0
      %1247 = vmatmul.mubr.f32.gmra.mrb[0].mxu0 %v232
      %v1248 = vpop.f32.mrb[0].mxu0
      %v1249 = vadd.f32 %v1150, %v1248
      %v1250 = vpop.f32.mrb[0].mxu0
      %1251 = vmatprep.mubr.f32.mxu0 0.0
      %1252 = vmatmul.mubr.f32.gmra.mrb[0].mxu0 %v233
      %v1253 = vpop.f32.mrb[0].mxu0
      %v1254 = vadd.f32 %v1150, %v1253
      %v1255 = vpop.f32.mrb[0].mxu0
      %1256 = vmatprep.mubr.f32.mxu0 0.0
      %1257 = vmatmul.mubr.f32.gmra.mrb[0].mxu0 %v234
      %v1258 = vpop.f32.mrb[0].mxu0
      %v1259 = vadd.f32 %v1150, %v1258
      %v1260 = vpop.f32.mrb[0].mxu0
      %1261 = vmatprep.mubr.f32.mxu0 0.0
      %1262 = vmatmul.mubr.f32.gmra.mrb[0].mxu0 %v235
      %v1263 = vpop.f32.mrb[0].mxu0
      %v1264 = vadd.f32 %v1150, %v1263
      %v1265 = vpop.f32.mrb[0].mxu0
      %1266 = vmatprep.mubr.f32.mxu0 0.0
      %1267 = vmatmul.mubr.f32.gmra.mrb[0].mxu0 %v236
      %v1268 = vpop.f32.mrb[0].mxu0
      %v1269 = vadd.f32 %v1150, %v1268
      %v1270 = vpop.f32.mrb[0].mxu0
      %1271 = vmatprep.mubr.f32.mxu0 0.0
      %1272 = vmatmul.mubr.f32.gmra.mrb[0].mxu0 %v237
      %v1273 = vpop.f32.mrb[0].mxu0
      %v1274 = vadd.f32 %v1150, %v1273
      %v1275 = vpop.f32.mrb[0].mxu0
      %1276 = vmatprep.mubr.f32.mxu0 0.0
      %1277 = vmatmul.mubr.f32.gmra.mrb[0].mxu0 %v238
      %v1278 = vpop.f32.mrb[0].mxu0
      %v1279 = vadd.f32 %v1150, %v1278
      %v1280 = vpop.f32.mrb[0].mxu0
      %1281 = vmatprep.mubr.f32.mxu0 0.0
      %1282 = vmatmul.mubr.f32.gmra.mrb[0].mxu0 %v239
      %v1283 = vpop.f32.mrb[0].mxu0
      %v1284 = vadd.f32 %v1150, %v1283
      %v1285 = vpop.f32.mrb[0].mxu0
      %1286 = vmatprep.mubr.f32.mxu0 0.0
      %1287 = vmatmul.mubr.f32.gmra.mrb[0].mxu0 %v240
      %v1288 = vpop.f32.mrb[0].mxu0
      %v1289 = vadd.f32 %v1150, %v1288
      %v1290 = vpop.f32.mrb[0].mxu0
      %1291 = vmatprep.mubr.f32.mxu0 0.0
      %1292 = vmatmul.mubr.f32.gmra.mrb[0].mxu0 %v241
      %v1293 = vpop.f32.mrb[0].mxu0
      %v1294 = vadd.f32 %v1150, %v1293
      %v1295 = vpop.f32.mrb[0].mxu0
      %1296 = vdwg.mxu0
      %v1297 = vmax.f32 %v1219, 0.0
      %v1298 = vmax.f32 %v1224, 0.0
      %v1299 = vmax.f32 %v1229, 0.0
      %v1300 = vmax.f32 %v1234, 0.0
      %v1301 = vmax.f32 %v1239, 0.0
      %v1302 = vmax.f32 %v1244, 0.0
      %v1303 = vmax.f32 %v1249, 0.0
      %v1304 = vmax.f32 %v1254, 0.0
      %v1305 = vmax.f32 %v1259, 0.0
      %v1306 = vmax.f32 %v1264, 0.0
      %v1307 = vmax.f32 %v1269, 0.0
      %v1308 = vmax.f32 %v1274, 0.0
      %v1309 = vmax.f32 %v1279, 0.0
      %v1310 = vmax.f32 %v1284, 0.0
      %v1311 = vmax.f32 %v1289, 0.0
      %v1312 = vmax.f32 %v1294, 0.0
      %v1313 = vld [vmem:[%s2] sm:$0xff]
      %v1314 = vld [vmem:[%s2 + $0x8] sm:$0xff]
      %1315 = vmatprep.subr.mxu0 0.0
      %1316 = vmatpush1.msra.mxu0 %v1297
      %1317 = vmatprep.subr.mxu0 0.0
      %1318 = vmatpush1.msra.mxu0 %v1298
      %1319 = vmatprep.subr.mxu0 0.0
      %1320 = vmatpush1.msra.mxu0 %v1299
      %1321 = vmatprep.subr.mxu0 0.0
      %1322 = vmatpush1.msra.mxu0 %v1300
      %1323 = vmatprep.subr.mxu0 0.0
      %1324 = vmatpush1.msra.mxu0 %v1301
      %1325 = vmatprep.subr.mxu0 0.0
      %1326 = vmatpush1.msra.mxu0 %v1302
      %1327 = vmatprep.subr.mxu0 0.0
      %1328 = vmatpush1.msra.mxu0 %v1303
      %1329 = vmatprep.subr.mxu0 0.0
      %1330 = vmatpush1.msra.mxu0 %v1304
      %1331 = vmatprep.subr.mxu0 0.0
      %1332 = vmatpush1.msra.mxu0 %v1305
      %1333 = vmatprep.subr.mxu0 0.0
      %1334 = vmatpush1.msra.mxu0 %v1306
      %1335 = vmatprep.subr.mxu0 0.0
      %1336 = vmatpush1.msra.mxu0 %v1307
      %1337 = vmatprep.subr.mxu0 0.0
      %1338 = vmatpush1.msra.mxu0 %v1308
      %1339 = vmatprep.subr.mxu0 0.0
      %1340 = vmatpush1.msra.mxu0 %v1309
      %1341 = vmatprep.subr.mxu0 0.0
      %1342 = vmatpush1.msra.mxu0 %v1310
      %1343 = vmatprep.subr.mxu0 0.0
      %1344 = vmatpush1.msra.mxu0 %v1311
      %1345 = vmatprep.subr.mxu0 0.0
      %1346 = vmatpush1.msra.mxu0 %v1312
      %1347 = vmatprep.subr.mxu0 0.0
      %1348 = vmatpush1.msra.mxu0 0.0
      %1349 = vmatprep.subr.mxu0 0.0
      %1350 = vmatpush1.msra.mxu0 0.0
      %1351 = vmatprep.subr.mxu0 0.0
      %1352 = vmatpush1.msra.mxu0 0.0
      %1353 = vmatprep.subr.mxu0 0.0
      %1354 = vmatpush1.msra.mxu0 0.0
      %1355 = vmatprep.subr.mxu0 0.0
      %1356 = vmatpush1.msra.mxu0 0.0
      %1357 = vmatprep.subr.mxu0 0.0
      %1358 = vmatpush1.msra.mxu0 0.0
      %1359 = vmatprep.subr.mxu0 0.0
      %1360 = vmatpush1.msra.mxu0 0.0
      %1361 = vmatprep.subr.mxu0 0.0
      %1362 = vmatpush1.msra.mxu0 0.0
      %1363 = vmatprep.subr.mxu0 0.0
      %1364 = vmatpush1.msra.mxu0 0.0
      %1365 = vmatprep.subr.mxu0 0.0
      %1366 = vmatpush1.msra.mxu0 0.0
      %1367 = vmatprep.subr.mxu0 0.0
      %1368 = vmatpush1.msra.mxu0 0.0
      %1369 = vmatprep.subr.mxu0 0.0
      %1370 = vmatpush1.msra.mxu0 0.0
      %1371 = vmatprep.subr.mxu0 0.0
      %1372 = vmatpush1.msra.mxu0 0.0
      %1373 = vmatprep.subr.mxu0 0.0
      %1374 = vmatpush1.msra.mxu0 0.0
      %1375 = vmatprep.subr.mxu0 0.0
      %1376 = vmatpush1.msra.mxu0 0.0
      %1377 = vmatprep.subr.mxu0 0.0
      %1378 = vmatpush1.msra.mxu0 0.0
      %1379 = vmatprep.mubr.f32.mxu0 0.0
      %1380 = vmatmul.mubr.f32.gmra.mrb[0].mxu0 %v1313
      %v1381 = vpop.f32.mrb[0].mxu0
      %v1382 = vadd.f32 0.0, %v1381
      %v1383 = vpop.f32.mrb[0].mxu0
      %1384 = vmatprep.mubr.f32.mxu0 0.0
      %1385 = vmatmul.mubr.f32.gmra.mrb[0].mxu0 %v1314
      %v1386 = vpop.f32.mrb[0].mxu0
      %v1387 = vadd.f32 0.0, %v1386
      %v1388 = vpop.f32.mrb[0].mxu0
      %1389 = vdwg.mxu0
      %v1390 = vpack.c.bf16 %v1387, %v1382
      %s1391 = scalar_lea.vmem %s3, 192
      %v1392 = vld [vmem:[%s1391] sm:$0xf]
      %v1393 = vld [vmem:[%s1391 + $0x4] sm:$0xf]
      %v1394 = vld [vmem:[%s1391 + $0x8] sm:$0xf]
      %v1395 = vld [vmem:[%s1391 + $0xc] sm:$0xf]
      %v1396 = vld [vmem:[%s1391 + $0x10] sm:$0xf]
      %v1397 = vld [vmem:[%s1391 + $0x14] sm:$0xf]
      %v1398 = vld [vmem:[%s1391 + $0x18] sm:$0xf]
      %v1399 = vld [vmem:[%s1391 + $0x1c] sm:$0xf]
      %v1400 = vld [vmem:[%s1391 + $0x20] sm:$0xf]
      %v1401 = vld [vmem:[%s1391 + $0x24] sm:$0xf]
      %v1402 = vld [vmem:[%s1391 + $0x28] sm:$0xf]
      %v1403 = vld [vmem:[%s1391 + $0x2c] sm:$0xf]
      %v1404 = vld [vmem:[%s1391 + $0x30] sm:$0xf]
      %v1405 = vld [vmem:[%s1391 + $0x34] sm:$0xf]
      %v1406 = vld [vmem:[%s1391 + $0x38] sm:$0xf]
      %v1407 = vld [vmem:[%s1391 + $0x3c] sm:$0xf]
      %s1408 = scalar_lea.vmem %s4, 3
      %v1409 = vld [vmem:[%s1408] sm:$0x1]
      %v1411 = vlaneseq
      %v1412 = vshrl.u32 %v1411, 7
      %v1413 = vsub.s32 0, %v1412
      %v1414 = vrot.slane %v1409, %v1413
      %v1432 = vunpack.c.l.b16 %v1392
      %v1433 = vunpack.c.l.b16 %v1393
      %v1434 = vunpack.c.l.b16 %v1394
      %v1435 = vunpack.c.l.b16 %v1395
      %v1436 = vunpack.c.l.b16 %v1396
      %v1437 = vunpack.c.l.b16 %v1397
      %v1438 = vunpack.c.l.b16 %v1398
      %v1439 = vunpack.c.l.b16 %v1399
      %v1440 = vunpack.c.l.b16 %v1400
      %v1441 = vunpack.c.l.b16 %v1401
      %v1442 = vunpack.c.l.b16 %v1402
      %v1443 = vunpack.c.l.b16 %v1403
      %v1444 = vunpack.c.l.b16 %v1404
      %v1445 = vunpack.c.l.b16 %v1405
      %v1446 = vunpack.c.l.b16 %v1406
      %v1447 = vunpack.c.l.b16 %v1407
      %v1448 = vpack.c.b16 %v1433, %v1432
      %v1449 = vpack.c.b16 %v1435, %v1434
      %v1450 = vpack.c.b16 %v1437, %v1436
      %v1451 = vpack.c.b16 %v1439, %v1438
      %v1452 = vpack.c.b16 %v1441, %v1440
      %v1453 = vpack.c.b16 %v1443, %v1442
      %v1454 = vpack.c.b16 %v1445, %v1444
      %v1455 = vpack.c.b16 %v1447, %v1446
      %1464 = vmatprep.subr.bf16.mxu0 0
      %1465 = vmatpush1.bf16.msra.mxu0 %v1448
      %1466 = vmatprep.subr.bf16.mxu0 0
      %1467 = vmatpush1.bf16.msra.mxu0 %v1449
      %1468 = vmatprep.subr.bf16.mxu0 0
      %1469 = vmatpush1.bf16.msra.mxu0 %v1450
      %1470 = vmatprep.subr.bf16.mxu0 0
      %1471 = vmatpush1.bf16.msra.mxu0 %v1451
      %1472 = vmatprep.subr.bf16.mxu0 0
      %1473 = vmatpush1.bf16.msra.mxu0 %v1452
      %1474 = vmatprep.subr.bf16.mxu0 0
      %1475 = vmatpush1.bf16.msra.mxu0 %v1453
      %1476 = vmatprep.subr.bf16.mxu0 0
      %1477 = vmatpush1.bf16.msra.mxu0 %v1454
      %1478 = vmatprep.subr.bf16.mxu0 0
      %1479 = vmatpush1.bf16.msra.mxu0 %v1455
      %1480 = vmatprep.subr.bf16.mxu0 0
      %1481 = vmatpush1.bf16.msra.mxu0 0
      %1482 = vmatprep.subr.bf16.mxu0 0
      %1483 = vmatpush1.bf16.msra.mxu0 0
      %1484 = vmatprep.subr.bf16.mxu0 0
      %1485 = vmatpush1.bf16.msra.mxu0 0
      %1486 = vmatprep.subr.bf16.mxu0 0
      %1487 = vmatpush1.bf16.msra.mxu0 0
      %1488 = vmatprep.subr.bf16.mxu0 0
      %1489 = vmatpush1.bf16.msra.mxu0 0
      %1490 = vmatprep.subr.bf16.mxu0 0
      %1491 = vmatpush1.bf16.msra.mxu0 0
      %1492 = vmatprep.subr.bf16.mxu0 0
      %1493 = vmatpush1.bf16.msra.mxu0 0
      %1494 = vmatprep.subr.bf16.mxu0 0
      %1495 = vmatpush1.bf16.msra.mxu0 0
      %1496 = vmatprep.mubr.bf16.mxu0 0
      %1497 = vmatmul.mubr.bf16.gmra.mrb[0].mxu0 %v1390
      %v1498 = vpop.f32.mrb[0].mxu0
      %v1499 = vadd.f32 %v1414, %v1498
      %v1500 = vpop.f32.mrb[0].mxu0
      %v1501 = vpop.f32.mrb[0].mxu0
      %v1502 = vadd.f32 %v1414, %v1501
      %v1503 = vpop.f32.mrb[0].mxu0
      %1504 = vdwg.mxu0
      %v1505 = vmax.f32 %v1499, 0.0
      %v1506 = vmax.f32 %v1502, 0.0
      %v1507 = vpack.c.bf16 %v1506, %v1505
      %s1508 = scalar_lea.vmem %s3, 256
      %v1509 = vld [vmem:[%s1508] sm:$0xf]
      %v1510 = vld [vmem:[%s1508 + $0x4] sm:$0xf]
      %v1511 = vld [vmem:[%s1508 + $0x8] sm:$0xf]
      %v1512 = vld [vmem:[%s1508 + $0xc] sm:$0xf]
      %v1513 = vld [vmem:[%s1508 + $0x10] sm:$0xf]
      %v1514 = vld [vmem:[%s1508 + $0x14] sm:$0xf]
      %v1515 = vld [vmem:[%s1508 + $0x18] sm:$0xf]
      %v1516 = vld [vmem:[%s1508 + $0x1c] sm:$0xf]
      %v1517 = vld [vmem:[%s1508 + $0x20] sm:$0xf]
      %v1518 = vld [vmem:[%s1508 + $0x24] sm:$0xf]
      %v1519 = vld [vmem:[%s1508 + $0x28] sm:$0xf]
      %v1520 = vld [vmem:[%s1508 + $0x2c] sm:$0xf]
      %v1521 = vld [vmem:[%s1508 + $0x30] sm:$0xf]
      %v1522 = vld [vmem:[%s1508 + $0x34] sm:$0xf]
      %v1523 = vld [vmem:[%s1508 + $0x38] sm:$0xf]
      %v1524 = vld [vmem:[%s1508 + $0x3c] sm:$0xf]
      %s1525 = scalar_lea.vmem %s4, 4
      %v1526 = vld [vmem:[%s1525] sm:$0x1]
      %v1528 = vlaneseq
      %v1529 = vshrl.u32 %v1528, 7
      %v1530 = vsub.s32 0, %v1529
      %v1531 = vrot.slane %v1526, %v1530
      %v1549 = vunpack.c.l.b16 %v1509
      %v1550 = vunpack.c.l.b16 %v1510
      %v1551 = vunpack.c.l.b16 %v1511
      %v1552 = vunpack.c.l.b16 %v1512
      %v1553 = vunpack.c.l.b16 %v1513
      %v1554 = vunpack.c.l.b16 %v1514
      %v1555 = vunpack.c.l.b16 %v1515
      %v1556 = vunpack.c.l.b16 %v1516
      %v1557 = vunpack.c.l.b16 %v1517
      %v1558 = vunpack.c.l.b16 %v1518
      %v1559 = vunpack.c.l.b16 %v1519
      %v1560 = vunpack.c.l.b16 %v1520
      %v1561 = vunpack.c.l.b16 %v1521
      %v1562 = vunpack.c.l.b16 %v1522
      %v1563 = vunpack.c.l.b16 %v1523
      %v1564 = vunpack.c.l.b16 %v1524
      %v1565 = vpack.c.b16 %v1550, %v1549
      %v1566 = vpack.c.b16 %v1552, %v1551
      %v1567 = vpack.c.b16 %v1554, %v1553
      %v1568 = vpack.c.b16 %v1556, %v1555
      %v1569 = vpack.c.b16 %v1558, %v1557
      %v1570 = vpack.c.b16 %v1560, %v1559
      %v1571 = vpack.c.b16 %v1562, %v1561
      %v1572 = vpack.c.b16 %v1564, %v1563
      %1581 = vmatprep.subr.bf16.mxu0 0
      %1582 = vmatpush1.bf16.msra.mxu0 %v1565
      %1583 = vmatprep.subr.bf16.mxu0 0
      %1584 = vmatpush1.bf16.msra.mxu0 %v1566
      %1585 = vmatprep.subr.bf16.mxu0 0
      %1586 = vmatpush1.bf16.msra.mxu0 %v1567
      %1587 = vmatprep.subr.bf16.mxu0 0
      %1588 = vmatpush1.bf16.msra.mxu0 %v1568
      %1589 = vmatprep.subr.bf16.mxu0 0
      %1590 = vmatpush1.bf16.msra.mxu0 %v1569
      %1591 = vmatprep.subr.bf16.mxu0 0
      %1592 = vmatpush1.bf16.msra.mxu0 %v1570
      %1593 = vmatprep.subr.bf16.mxu0 0
      %1594 = vmatpush1.bf16.msra.mxu0 %v1571
      %1595 = vmatprep.subr.bf16.mxu0 0
      %1596 = vmatpush1.bf16.msra.mxu0 %v1572
      %1597 = vmatprep.subr.bf16.mxu0 0
      %1598 = vmatpush1.bf16.msra.mxu0 0
      %1599 = vmatprep.subr.bf16.mxu0 0
      %1600 = vmatpush1.bf16.msra.mxu0 0
      %1601 = vmatprep.subr.bf16.mxu0 0
      %1602 = vmatpush1.bf16.msra.mxu0 0
      %1603 = vmatprep.subr.bf16.mxu0 0
      %1604 = vmatpush1.bf16.msra.mxu0 0
      %1605 = vmatprep.subr.bf16.mxu0 0
      %1606 = vmatpush1.bf16.msra.mxu0 0
      %1607 = vmatprep.subr.bf16.mxu0 0
      %1608 = vmatpush1.bf16.msra.mxu0 0
      %1609 = vmatprep.subr.bf16.mxu0 0
      %1610 = vmatpush1.bf16.msra.mxu0 0
      %1611 = vmatprep.subr.bf16.mxu0 0
      %1612 = vmatpush1.bf16.msra.mxu0 0
      %1613 = vmatprep.mubr.bf16.mxu0 0
      %1614 = vmatmul.mubr.bf16.gmra.mrb[0].mxu0 %v1507
      %v1615 = vpop.f32.mrb[0].mxu0
      %v1616 = vadd.f32 %v1531, %v1615
      %v1617 = vpop.f32.mrb[0].mxu0
      %v1618 = vpop.f32.mrb[0].mxu0
      %v1619 = vadd.f32 %v1531, %v1618
      %v1620 = vpop.f32.mrb[0].mxu0
      %1621 = vdwg.mxu0
      %1622 = vst [vmem:[%s224] sm:$0xff] %v1616
      %1623 = vst [vmem:[%s224 + $0x8] sm:$0xff] %v1619
      %p1624 = scmp.lt.s32.totalorder %s16, 1
      %s1625 = scalar_select %p1624, %s16, 1
      %s1626 = smul.addr %s1625, 2
      %s1627 = smul.addr %s1626, 8
      %s1628 = scalar_lea.vmem %s5, %s1627
      // Predicated region
      $region41: #{fwd.1} parent=39 // pred_check
        %p1629 = pneg %p144
      $region42: #{fwd.1} parent=39 // pred_check_branch
        %1631 = sbr.rel (%p1629) target = $region44
      $region43: #{fwd.1} parent=39 // pred_region
        _
      $region44: #{fwd.1} parent=39 // pred_fallthru
        _
    $region40: #{fwd.1} parent=5 // pred_fallthru
      _
    %p1632 = scmp.le.s32.totalorder 2, %s11
    // Predicated region
    $region45: #{fwd.1} parent=5 // pred_check
      %p1633 = pneg %p1632
    $region46: #{fwd.1} parent=5 // pred_check_branch
      %1635 = sbr.rel (%p1633) target = $region48
    $region47: #{fwd.1} parent=5 // pred_region
      %s1636 = ssub.s32 %s11, 2
      // Predicated region
      $region49: #{fwd.1} parent=47 // pred_check
        %p1637 = pneg %p150
      $region50: #{fwd.1} parent=47 // pred_check_branch
        %1639 = sbr.rel (%p1637) target = $region52
      $region51: #{fwd.1} parent=47 // pred_region
        %p1640 = scmp.lt.s32.totalorder %s17, 1
        %s1641 = scalar_select %p1640, %s17, 1
        %s1642 = smul.addr %s1641, 2
        %s1643 = smul.addr %s1642, 8
        %s1644 = scalar_lea.vmem %s5, %s1643
      $region52: #{fwd.1} parent=47 // pred_fallthru
        _
    $region48: #{fwd.1} parent=5 // pred_fallthru
      _
  $region6: #{fwd.1} parent=0 // loop_footer
    %s15 = sadd.s32 1, %s11
  $region7: #{fwd.1} parent=0 // loop_footer_branch
    %10 = sbr.rel target = $region3
  $region8: #{fwd.1} parent=0 // loop_exit
    _

</llo_original>
